<compile_context>
chip_gen: v5e
topology: v5e:2x2
jax: 0.10.0
libtpu: 0.0.40
codegen_flags: <defaults>
</compile_context>

<pallas_src>
import functools

import jax
import jax.numpy as jnp
from jax.experimental import pallas as pl
from jax.experimental.pallas import tpu as pltpu


# -----------------------------------------------------------------------------
# Fused kernel: AvgPool(k) -> Conv3x3+BN+ReLU -> DW3x3+BN+ReLU [-> DW3x3+BN+ReLU]
#               -> Conv1x1+BN+ReLU, one batch image per grid step, all in VMEM.
# -----------------------------------------------------------------------------
def _dsample_kernel(x_ref, w_in_ref, s_in_ref, b_in_ref,
                    w_dw1_ref, s_dw1_ref, b_dw1_ref,
                    w_dw2_ref, s_dw2_ref, b_dw2_ref,
                    w_out_ref, s_out_ref, b_out_ref,
                    o_ref,
                    pad_in_ref, col_ref, pad_ex_ref,
                    *, k, use_dw2):
    H, W, Cin = x_ref.shape[1], x_ref.shape[2], x_ref.shape[3]
    Hp, Wp = H // k, W // k
    HWp = Hp * Wp
    Cex = w_in_ref.shape[1]
    Cout = o_ref.shape[3]

    # ---- AvgPool2d(k): pooled intermediate never leaves VMEM ----------------
    x = x_ref[0].astype(jnp.float32)                                # (H, W, Cin)
    pooled = jnp.sum(x.reshape(Hp, k, Wp, k, Cin), axis=(1, 3)) * (1.0 / (k * k))

    # ---- Conv3x3 (Cin->Cex) + BN + ReLU as ONE im2col bf16 MXU matmul -------
    # Halo handled by a zero-initialised VMEM scratch (no XLA jnp.pad).
    pad_in_ref[...] = jnp.zeros_like(pad_in_ref)
    pad_in_ref[1:Hp + 1, 1:Wp + 1, :] = pooled
    for t in range(9):
        dy, dx = divmod(t, 3)
        slab = pad_in_ref[dy:dy + Hp, dx:dx + Wp, :].reshape(HWp, Cin)
        col_ref[:, t * Cin:(t + 1) * Cin] = slab                    # im2col slab
    y = jnp.dot(col_ref[...].astype(jnp.bfloat16),                  # (HWp, 9*Cin)
                w_in_ref[...].astype(jnp.bfloat16),                 # (9*Cin, Cex)
                preferred_element_type=jnp.float32)                 # (HWp, Cex) f32
    y = jnp.maximum(y * s_in_ref[...] + b_in_ref[...], 0.0)
    y = y.reshape(Hp, Wp, Cex)

    # ---- Depthwise 3x3 (groups=Cex) + BN + ReLU (applied once or twice) -----
    def dw_stage(inp, w_ref, s_ref, b_ref):
        pad_ex_ref[...] = jnp.zeros_like(pad_ex_ref)
        pad_ex_ref[1:Hp + 1, 1:Wp + 1, :] = inp
        acc = jnp.zeros((Hp, Wp, Cex), jnp.float32)
        for t in range(9):
            dy, dx = divmod(t, 3)
            tap = w_ref[t]                                          # (1, Cex)
            acc = acc + pad_ex_ref[dy:dy + Hp, dx:dx + Wp, :] * tap[None, :, :]
        return jnp.maximum(acc * s_ref[...][None, :, :] +
                           b_ref[...][None, :, :], 0.0)

    y = dw_stage(y, w_dw1_ref, s_dw1_ref, b_dw1_ref)
    if use_dw2:                                                     # scale == 4
        y = dw_stage(y, w_dw2_ref, s_dw2_ref, b_dw2_ref)

    # ---- Conv1x1 (Cex->Cout) + BN + ReLU epilogue on the resident tile ------
    z = jnp.dot(y.reshape(HWp, Cex).astype(jnp.bfloat16),
                w_out_ref[...].astype(jnp.bfloat16),
                preferred_element_type=jnp.float32)                 # (HWp, Cout)
    z = jnp.maximum(z * s_out_ref[...] + b_out_ref[...], 0.0)
    o_ref[0] = z.reshape(Hp, Wp, Cout).astype(o_ref.dtype)


# -----------------------------------------------------------------------------
# Public forward (PyTorch NCHW interface)
# -----------------------------------------------------------------------------
def dsample_forward(x_nchw, params, scale=2):
    """Mirrors dsample.forward: (N, Cin, H, W) -> (N, Cout, H//scale, W//scale)."""
    assert scale in (2, 4)
    N, Cin, H, W = x_nchw.shape
    assert H % scale == 0 and W % scale == 0, "AvgPool2d here expects divisible H, W"
    Hp, Wp = H // scale, W // scale
    Cex = params["w_in"].shape[1]
    Cout = params["w_out"].shape[1]

    x = jnp.transpose(x_nchw, (0, 2, 3, 1))           # NCHW -> NHWC (tiny boundary op)

    kernel = functools.partial(_dsample_kernel, k=scale, use_dw2=(scale == 4))
    y = pl.pallas_call(
        kernel,
        out_shape=jax.ShapeDtypeStruct((N, Hp, Wp, Cout), x.dtype),
        grid=(N,),
        in_specs=[
            pl.BlockSpec((1, H, W, Cin), lambda n: (n, 0, 0, 0)),
            pl.BlockSpec((9 * Cin, Cex), lambda n: (0, 0)),
            pl.BlockSpec((1, Cex), lambda n: (0, 0)),
            pl.BlockSpec((1, Cex), lambda n: (0, 0)),
            pl.BlockSpec((9, 1, Cex), lambda n: (0, 0, 0)),
            pl.BlockSpec((1, Cex), lambda n: (0, 0)),
            pl.BlockSpec((1, Cex), lambda n: (0, 0)),
            pl.BlockSpec((9, 1, Cex), lambda n: (0, 0, 0)),
            pl.BlockSpec((1, Cex), lambda n: (0, 0)),
            pl.BlockSpec((1, Cex), lambda n: (0, 0)),
            pl.BlockSpec((Cex, Cout), lambda n: (0, 0)),
            pl.BlockSpec((1, Cout), lambda n: (0, 0)),
            pl.BlockSpec((1, Cout), lambda n: (0, 0)),
        ],
        out_specs=pl.BlockSpec((1, Hp, Wp, Cout), lambda n: (n, 0, 0, 0)),
        scratch_shapes=[
            pltpu.VMEM((Hp + 2, Wp + 2, Cin), jnp.float32),   # halo pad, 3x3 conv
            pltpu.VMEM((Hp * Wp, 9 * Cin), jnp.float32),      # im2col slab
            pltpu.VMEM((Hp + 2, Wp + 2, Cex), jnp.float32),   # halo pad, depthwise
        ],
        compiler_params=pltpu.CompilerParams(
            dimension_semantics=("parallel",),
            vmem_limit_bytes=32 * 1024 * 1024,
        ),
    )(x, params["w_in"], params["s_in"], params["b_in"],
      params["w_dw1"], params["s_dw1"], params["b_dw1"],
      params["w_dw2"], params["s_dw2"], params["b_dw2"],
      params["w_out"], params["s_out"], params["b_out"])

    return jnp.transpose(y, (0, 3, 1, 2))             # NHWC -> NCHW


# -----------------------------------------------------------------------------
# Parameters (BatchNorm folded into per-channel scale/bias)
# -----------------------------------------------------------------------------
def _fold_bn(gamma, beta, conv_bias, running_mean=None, running_var=None, eps=1e-5):
    """Fold eval-mode BatchNorm (general running stats) + conv bias into scale/bias."""
    if running_mean is None:
        running_mean = jnp.zeros_like(gamma)
    if running_var is None:
        running_var = jnp.ones_like(gamma)
    scale = gamma / jnp.sqrt(running_var + eps)
    bias = beta + scale * (conv_bias - running_mean)
    return scale[None, :], bias[None, :]


def init_params(key, in_channels, ex_channels, out_channels):
    ks = jax.random.split(key, 16)
    f32 = jnp.float32
    p = {}

    # conv_bn_relu_in : Conv2d(in, ex, 3, 1, 1) + BN(ex)
    w = jax.random.normal(ks[0], (3, 3, in_channels, ex_channels), f32) * 0.2
    p["w_in"] = w.reshape(9 * in_channels, ex_channels)      # im2col (tap-major) layout
    g = 1.0 + 0.1 * jax.random.normal(ks[1], (ex_channels,), f32)
    b = 0.1 * jax.random.normal(ks[2], (ex_channels,), f32)
    cb = 0.05 * jax.random.normal(ks[3], (ex_channels,), f32)
    p["s_in"], p["b_in"] = _fold_bn(g, b, cb)

    # dwconv_bn_relu_{1,2}: Conv2d(ex, ex, 3, 1, 1, groups=ex) + BN(ex)
    for base, name in ((4, "dw1"), (8, "dw2")):
        w = jax.random.normal(ks[base], (3, 3, ex_channels), f32) * 0.3
        p[f"w_{name}"] = w.reshape(9, 1, ex_channels)
        g = 1.0 + 0.1 * jax.random.normal(ks[base + 1], (ex_channels,), f32)
        b = 0.1 * jax.random.normal(ks[base + 2], (ex_channels,), f32)
        cb = 0.05 * jax.random.normal(ks[base + 3], (ex_channels,), f32)
        p[f"s_{name}"], p[f"b_{name}"] = _fold_bn(g, b, cb)

    # conv_bn_relu_out: Conv2d(ex, out, 1, 1, 0) + BN(out)
    p["w_out"] = jax.random.normal(ks[12], (ex_channels, out_channels), f32) * 0.2
    g = 1.0 + 0.1 * jax.random.normal(ks[13], (out_channels,), f32)
    b = 0.1 * jax.random.normal(ks[14], (out_channels,), f32)
    cb = 0.05 * jax.random.normal(ks[15], (out_channels,), f32)
    p["s_out"], p["b_out"] = _fold_bn(g, b, cb)
    return p


# -----------------------------------------------------------------------------
# Pure-JAX reference with the same bf16-matmul / f32-elsewhere numerics
# -----------------------------------------------------------------------------
def dsample_reference(x_nchw, params, scale=2):
    f32 = jnp.float32
    k = scale
    x = jnp.transpose(x_nchw, (0, 2, 3, 1)).astype(f32)      # NHWC
    N, H, W, Cin = x.shape
    Hp, Wp = H // k, W // k
    x = jnp.mean(x.reshape(N, Hp, k, Wp, k, Cin), axis=(2, 4))

    Cex = params["w_in"].shape[1]
    Cout = params["w_out"].shape[1]
    w_in = params["w_in"].reshape(3, 3, Cin, Cex)
    y = jax.lax.conv_general_dilated(
        x.astype(jnp.bfloat16), w_in.astype(jnp.bfloat16),
        window_strides=(1, 1), padding="SAME",
        dimension_numbers=("NHWC", "HWIO", "NHWC"),
        preferred_element_type=f32)
    y = jnp.maximum(y * params["s_in"] + params["b_in"], 0.0)

    def dw(y, w, s, b):
        yp = jnp.pad(y, ((0, 0), (1, 1), (1, 1), (0, 0)))
        acc = jnp.zeros_like(y)
        for t in range(9):
            dy, dx = divmod(t, 3)
            acc = acc + yp[:, dy:dy + Hp, dx:dx + Wp, :] * w[t]
        return jnp.maximum(acc * s + b, 0.0)

    y = dw(y, params["w_dw1"], params["s_dw1"], params["b_dw1"])
    if scale == 4:
        y = dw(y, params["w_dw2"], params["s_dw2"], params["b_dw2"])

    z = jnp.dot(y.reshape(-1, Cex).astype(jnp.bfloat16),
                params["w_out"].astype(jnp.bfloat16),
                preferred_element_type=f32)
    z = jnp.maximum(z * params["s_out"] + params["b_out"], 0.0)
    z = z.reshape(N, Hp, Wp, Cout)
    return jnp.transpose(z, (0, 3, 1, 2))


if __name__ == "__main__":
    key = jax.random.PRNGKey(0)
    k_x, k_p = jax.random.split(key)

    N, Cin, H, W = 2, 4, 16, 16
    Cex, Cout = 8, 8

    x = jax.random.normal(k_x, (N, Cin, H, W), jnp.float32)
    params = init_params(k_p, Cin, Cex, Cout)

    for scale in (2, 4):
        y = jax.block_until_ready(dsample_forward(x, params, scale=scale))
        assert y.shape == (N, Cout, H // scale, W // scale), y.shape
        assert bool(jnp.all(y >= 0.0))                      # ReLU output
        y_ref = jax.block_until_ready(dsample_reference(x, params, scale=scale))
        err = float(jnp.max(jnp.abs(y - y_ref)))
        assert err < 5e-3, f"scale={scale}: max |err| = {err}"

    print("KERNEL_OK")
</pallas_src>

<mosaic_0001>
module attributes {stable_mosaic.version = 11 : i64} {
  func.func @_dsample_kernel(%arg0: i32, %arg1: memref<1x16x16x4xf32, #tpu.memory_space<vmem>>, %arg2: memref<36x8xf32, #tpu.memory_space<vmem>>, %arg3: memref<1x8xf32, #tpu.memory_space<vmem>>, %arg4: memref<1x8xf32, #tpu.memory_space<vmem>>, %arg5: memref<9x1x8xf32, #tpu.memory_space<vmem>>, %arg6: memref<1x8xf32, #tpu.memory_space<vmem>>, %arg7: memref<1x8xf32, #tpu.memory_space<vmem>>, %arg8: memref<9x1x8xf32, #tpu.memory_space<vmem>>, %arg9: memref<1x8xf32, #tpu.memory_space<vmem>>, %arg10: memref<1x8xf32, #tpu.memory_space<vmem>>, %arg11: memref<8x8xf32, #tpu.memory_space<vmem>>, %arg12: memref<1x8xf32, #tpu.memory_space<vmem>>, %arg13: memref<1x8xf32, #tpu.memory_space<vmem>>, %arg14: memref<1x8x8x8xf32, #tpu.memory_space<vmem>>, %arg15: memref<10x10x4xf32, #tpu.memory_space<vmem>>, %arg16: memref<64x36xf32, #tpu.memory_space<vmem>>, %arg17: memref<10x10x8xf32, #tpu.memory_space<vmem>>) attributes {dimension_semantics = [#tpu.dimension_semantics<parallel>], iteration_bounds = array<i64: 2>, scalar_prefetch = 0 : i64, scratch_operands = 3 : i64, tpu.core_type = #tpu.core_type<tc>, window_params = [{transform_indices = @transform_0, window_bounds = array<i64: 1, 16, 16, 4>}, {pipeline_mode = #tpu.pipeline_mode<synchronous>, transform_indices = @transform_1, window_bounds = array<i64: 36, 8>}, {pipeline_mode = #tpu.pipeline_mode<synchronous>, transform_indices = @transform_2, window_bounds = array<i64: 1, 8>}, {pipeline_mode = #tpu.pipeline_mode<synchronous>, transform_indices = @transform_3, window_bounds = array<i64: 1, 8>}, {pipeline_mode = #tpu.pipeline_mode<synchronous>, transform_indices = @transform_4, window_bounds = array<i64: 9, 1, 8>}, {pipeline_mode = #tpu.pipeline_mode<synchronous>, transform_indices = @transform_5, window_bounds = array<i64: 1, 8>}, {pipeline_mode = #tpu.pipeline_mode<synchronous>, transform_indices = @transform_6, window_bounds = array<i64: 1, 8>}, {pipeline_mode = #tpu.pipeline_mode<synchronous>, transform_indices = @transform_7, window_bounds = array<i64: 9, 1, 8>}, {pipeline_mode = #tpu.pipeline_mode<synchronous>, transform_indices = @transform_8, window_bounds = array<i64: 1, 8>}, {pipeline_mode = #tpu.pipeline_mode<synchronous>, transform_indices = @transform_9, window_bounds = array<i64: 1, 8>}, {pipeline_mode = #tpu.pipeline_mode<synchronous>, transform_indices = @transform_10, window_bounds = array<i64: 8, 8>}, {pipeline_mode = #tpu.pipeline_mode<synchronous>, transform_indices = @transform_11, window_bounds = array<i64: 1, 8>}, {pipeline_mode = #tpu.pipeline_mode<synchronous>, transform_indices = @transform_12, window_bounds = array<i64: 1, 8>}, {transform_indices = @transform_13, window_bounds = array<i64: 1, 8, 8, 8>}]} {
    %c0 = arith.constant 0 : index
    %c0_0 = arith.constant 0 : index
    %c0_1 = arith.constant 0 : index
    %c0_2 = arith.constant 0 : index
    %0 = vector.load %arg1[%c0, %c0_0, %c0_1, %c0_2] : memref<1x16x16x4xf32, #tpu.memory_space<vmem>>, vector<1x16x16x4xf32>
    %1 = vector.shape_cast %0 : vector<1x16x16x4xf32> to vector<16x16x4xf32>
    %2 = vector.shape_cast %1 : vector<16x16x4xf32> to vector<8x2x8x2x4xf32>
    %cst = arith.constant dense<0.000000e+00> : vector<8x8x4xf32>
    %3 = vector.multi_reduction <add>, %2, %cst [1, 3] : vector<8x2x8x2x4xf32> to vector<8x8x4xf32>
    %cst_3 = arith.constant 2.500000e-01 : f32
    %4 = vector.broadcast %cst_3 : f32 to vector<8x8x4xf32>
    %5 = arith.mulf %3, %4 : vector<8x8x4xf32>
    %cst_4 = arith.constant 0.000000e+00 : f32
    %6 = vector.broadcast %cst_4 : f32 to vector<10x10x4xf32>
    %c0_5 = arith.constant 0 : index
    %c0_6 = arith.constant 0 : index
    %c0_7 = arith.constant 0 : index
    %7 = vector.load %arg15[%c0_5, %c0_6, %c0_7] : memref<10x10x4xf32, #tpu.memory_space<vmem>>, vector<10x10x4xf32>
    tpu.vector_store %arg15[%c0_5, %c0_6, %c0_7], %6 {strides = array<i32>} : memref<10x10x4xf32, #tpu.memory_space<vmem>>, vector<10x10x4xf32>,
    %c1 = arith.constant 1 : index
    %c1_8 = arith.constant 1 : index
    %c0_9 = arith.constant 0 : index
    %8 = vector.load %arg15[%c1, %c1_8, %c0_9] : memref<10x10x4xf32, #tpu.memory_space<vmem>>, vector<8x8x4xf32>
    tpu.vector_store %arg15[%c1, %c1_8, %c0_9], %5 {strides = array<i32>} : memref<10x10x4xf32, #tpu.memory_space<vmem>>, vector<8x8x4xf32>,
    %c0_10 = arith.constant 0 : index
    %c0_11 = arith.constant 0 : index
    %c0_12 = arith.constant 0 : index
    %9 = vector.load %arg15[%c0_10, %c0_11, %c0_12] : memref<10x10x4xf32, #tpu.memory_space<vmem>>, vector<8x8x4xf32>
    %10 = vector.shape_cast %9 : vector<8x8x4xf32> to vector<64x4xf32>
    %c0_13 = arith.constant 0 : index
    %c0_14 = arith.constant 0 : index
    %11 = vector.load %arg16[%c0_13, %c0_14] : memref<64x36xf32, #tpu.memory_space<vmem>>, vector<64x4xf32>
    tpu.vector_store %arg16[%c0_13, %c0_14], %10 {strides = array<i32>} : memref<64x36xf32, #tpu.memory_space<vmem>>, vector<64x4xf32>,
    %c0_15 = arith.constant 0 : index
    %c1_16 = arith.constant 1 : index
    %c0_17 = arith.constant 0 : index
    %12 = vector.load %arg15[%c0_15, %c1_16, %c0_17] : memref<10x10x4xf32, #tpu.memory_space<vmem>>, vector<8x8x4xf32>
    %13 = vector.shape_cast %12 : vector<8x8x4xf32> to vector<64x4xf32>
    %c0_18 = arith.constant 0 : index
    %c4 = arith.constant 4 : index
    %14 = vector.load %arg16[%c0_18, %c4] : memref<64x36xf32, #tpu.memory_space<vmem>>, vector<64x4xf32>
    tpu.vector_store %arg16[%c0_18, %c4], %13 {strides = array<i32>} : memref<64x36xf32, #tpu.memory_space<vmem>>, vector<64x4xf32>,
    %c0_19 = arith.constant 0 : index
    %c2 = arith.constant 2 : index
    %c0_20 = arith.constant 0 : index
    %15 = vector.load %arg15[%c0_19, %c2, %c0_20] : memref<10x10x4xf32, #tpu.memory_space<vmem>>, vector<8x8x4xf32>
    %16 = vector.shape_cast %15 : vector<8x8x4xf32> to vector<64x4xf32>
    %c0_21 = arith.constant 0 : index
    %c8 = arith.constant 8 : index
    %17 = vector.load %arg16[%c0_21, %c8] : memref<64x36xf32, #tpu.memory_space<vmem>>, vector<64x4xf32>
    tpu.vector_store %arg16[%c0_21, %c8], %16 {strides = array<i32>} : memref<64x36xf32, #tpu.memory_space<vmem>>, vector<64x4xf32>,
    %c1_22 = arith.constant 1 : index
    %c0_23 = arith.constant 0 : index
    %c0_24 = arith.constant 0 : index
    %18 = vector.load %arg15[%c1_22, %c0_23, %c0_24] : memref<10x10x4xf32, #tpu.memory_space<vmem>>, vector<8x8x4xf32>
    %19 = vector.shape_cast %18 : vector<8x8x4xf32> to vector<64x4xf32>
    %c0_25 = arith.constant 0 : index
    %c12 = arith.constant 12 : index
    %20 = vector.load %arg16[%c0_25, %c12] : memref<64x36xf32, #tpu.memory_space<vmem>>, vector<64x4xf32>
    tpu.vector_store %arg16[%c0_25, %c12], %19 {strides = array<i32>} : memref<64x36xf32, #tpu.memory_space<vmem>>, vector<64x4xf32>,
    %c1_26 = arith.constant 1 : index
    %c1_27 = arith.constant 1 : index
    %c0_28 = arith.constant 0 : index
    %21 = vector.load %arg15[%c1_26, %c1_27, %c0_28] : memref<10x10x4xf32, #tpu.memory_space<vmem>>, vector<8x8x4xf32>
    %22 = vector.shape_cast %21 : vector<8x8x4xf32> to vector<64x4xf32>
    %c0_29 = arith.constant 0 : index
    %c16 = arith.constant 16 : index
    %23 = vector.load %arg16[%c0_29, %c16] : memref<64x36xf32, #tpu.memory_space<vmem>>, vector<64x4xf32>
    tpu.vector_store %arg16[%c0_29, %c16], %22 {strides = array<i32>} : memref<64x36xf32, #tpu.memory_space<vmem>>, vector<64x4xf32>,
    %c1_30 = arith.constant 1 : index
    %c2_31 = arith.constant 2 : index
    %c0_32 = arith.constant 0 : index
    %24 = vector.load %arg15[%c1_30, %c2_31, %c0_32] : memref<10x10x4xf32, #tpu.memory_space<vmem>>, vector<8x8x4xf32>
    %25 = vector.shape_cast %24 : vector<8x8x4xf32> to vector<64x4xf32>
    %c0_33 = arith.constant 0 : index
    %c20 = arith.constant 20 : index
    %26 = vector.load %arg16[%c0_33, %c20] : memref<64x36xf32, #tpu.memory_space<vmem>>, vector<64x4xf32>
    tpu.vector_store %arg16[%c0_33, %c20], %25 {strides = array<i32>} : memref<64x36xf32, #tpu.memory_space<vmem>>, vector<64x4xf32>,
    %c2_34 = arith.constant 2 : index
    %c0_35 = arith.constant 0 : index
    %c0_36 = arith.constant 0 : index
    %27 = vector.load %arg15[%c2_34, %c0_35, %c0_36] : memref<10x10x4xf32, #tpu.memory_space<vmem>>, vector<8x8x4xf32>
    %28 = vector.shape_cast %27 : vector<8x8x4xf32> to vector<64x4xf32>
    %c0_37 = arith.constant 0 : index
    %c24 = arith.constant 24 : index
    %29 = vector.load %arg16[%c0_37, %c24] : memref<64x36xf32, #tpu.memory_space<vmem>>, vector<64x4xf32>
    tpu.vector_store %arg16[%c0_37, %c24], %28 {strides = array<i32>} : memref<64x36xf32, #tpu.memory_space<vmem>>, vector<64x4xf32>,
    %c2_38 = arith.constant 2 : index
    %c1_39 = arith.constant 1 : index
    %c0_40 = arith.constant 0 : index
    %30 = vector.load %arg15[%c2_38, %c1_39, %c0_40] : memref<10x10x4xf32, #tpu.memory_space<vmem>>, vector<8x8x4xf32>
    %31 = vector.shape_cast %30 : vector<8x8x4xf32> to vector<64x4xf32>
    %c0_41 = arith.constant 0 : index
    %c28 = arith.constant 28 : index
    %32 = vector.load %arg16[%c0_41, %c28] : memref<64x36xf32, #tpu.memory_space<vmem>>, vector<64x4xf32>
    tpu.vector_store %arg16[%c0_41, %c28], %31 {strides = array<i32>} : memref<64x36xf32, #tpu.memory_space<vmem>>, vector<64x4xf32>,
    %c2_42 = arith.constant 2 : index
    %c2_43 = arith.constant 2 : index
    %c0_44 = arith.constant 0 : index
    %33 = vector.load %arg15[%c2_42, %c2_43, %c0_44] : memref<10x10x4xf32, #tpu.memory_space<vmem>>, vector<8x8x4xf32>
    %34 = vector.shape_cast %33 : vector<8x8x4xf32> to vector<64x4xf32>
    %c0_45 = arith.constant 0 : index
    %c32 = arith.constant 32 : index
    %35 = vector.load %arg16[%c0_45, %c32] : memref<64x36xf32, #tpu.memory_space<vmem>>, vector<64x4xf32>
    tpu.vector_store %arg16[%c0_45, %c32], %34 {strides = array<i32>} : memref<64x36xf32, #tpu.memory_space<vmem>>, vector<64x4xf32>,
    %c0_46 = arith.constant 0 : index
    %c0_47 = arith.constant 0 : index
    %36 = vector.load %arg16[%c0_46, %c0_47] : memref<64x36xf32, #tpu.memory_space<vmem>>, vector<64x36xf32>
    %37 = arith.truncf %36 : vector<64x36xf32> to vector<64x36xbf16>
    %c0_48 = arith.constant 0 : index
    %c0_49 = arith.constant 0 : index
    %38 = vector.load %arg2[%c0_48, %c0_49] : memref<36x8xf32, #tpu.memory_space<vmem>>, vector<36x8xf32>
    %39 = arith.truncf %38 : vector<36x8xf32> to vector<36x8xbf16>
    %cst_50 = arith.constant dense<0.000000e+00> : vector<64x8xf32>
    %40 = tpu.matmul %37, %39, %cst_50 {dimension_numbers = #tpu.dot_dimension_numbers<[1], [0], [0], [1], [0, 0, 1, 1], [], []>} : vector<64x36xbf16>, vector<36x8xbf16>, vector<64x8xf32> -> vector<64x8xf32>
    %c0_51 = arith.constant 0 : index
    %c0_52 = arith.constant 0 : index
    %41 = vector.load %arg3[%c0_51, %c0_52] : memref<1x8xf32, #tpu.memory_space<vmem>>, vector<1x8xf32>
    %42 = vector.broadcast %41 : vector<1x8xf32> to vector<64x8xf32>
    %43 = arith.mulf %40, %42 : vector<64x8xf32>
    %c0_53 = arith.constant 0 : index
    %c0_54 = arith.constant 0 : index
    %44 = vector.load %arg4[%c0_53, %c0_54] : memref<1x8xf32, #tpu.memory_space<vmem>>, vector<1x8xf32>
    %45 = vector.broadcast %44 : vector<1x8xf32> to vector<64x8xf32>
    %46 = arith.addf %43, %45 : vector<64x8xf32>
    %cst_55 = arith.constant 0.000000e+00 : f32
    %47 = vector.broadcast %cst_55 : f32 to vector<64x8xf32>
    %48 = arith.maximumf %46, %47 : vector<64x8xf32>
    %49 = vector.shape_cast %48 : vector<64x8xf32> to vector<8x8x8xf32>
    %cst_56 = arith.constant 0.000000e+00 : f32
    %50 = vector.broadcast %cst_56 : f32 to vector<10x10x8xf32>
    %c0_57 = arith.constant 0 : index
    %c0_58 = arith.constant 0 : index
    %c0_59 = arith.constant 0 : index
    %51 = vector.load %arg17[%c0_57, %c0_58, %c0_59] : memref<10x10x8xf32, #tpu.memory_space<vmem>>, vector<10x10x8xf32>
    tpu.vector_store %arg17[%c0_57, %c0_58, %c0_59], %50 {strides = array<i32>} : memref<10x10x8xf32, #tpu.memory_space<vmem>>, vector<10x10x8xf32>,
    %c1_60 = arith.constant 1 : index
    %c1_61 = arith.constant 1 : index
    %c0_62 = arith.constant 0 : index
    %52 = vector.load %arg17[%c1_60, %c1_61, %c0_62] : memref<10x10x8xf32, #tpu.memory_space<vmem>>, vector<8x8x8xf32>
    tpu.vector_store %arg17[%c1_60, %c1_61, %c0_62], %49 {strides = array<i32>} : memref<10x10x8xf32, #tpu.memory_space<vmem>>, vector<8x8x8xf32>,
    %cst_63 = arith.constant 0.000000e+00 : f32
    %53 = vector.broadcast %cst_63 : f32 to vector<8x8x8xf32>
    %c0_64 = arith.constant 0 : index
    %c0_65 = arith.constant 0 : index
    %c0_66 = arith.constant 0 : index
    %54 = vector.load %arg5[%c0_64, %c0_65, %c0_66] : memref<9x1x8xf32, #tpu.memory_space<vmem>>, vector<1x1x8xf32>
    %55 = vector.shape_cast %54 : vector<1x1x8xf32> to vector<1x8xf32>
    %c0_67 = arith.constant 0 : index
    %c0_68 = arith.constant 0 : index
    %c0_69 = arith.constant 0 : index
    %56 = vector.load %arg17[%c0_67, %c0_68, %c0_69] : memref<10x10x8xf32, #tpu.memory_space<vmem>>, vector<8x8x8xf32>
    %57 = vector.shape_cast %55 : vector<1x8xf32> to vector<1x1x8xf32>
    %58 = vector.broadcast %57 : vector<1x1x8xf32> to vector<8x8x8xf32>
    %59 = arith.mulf %56, %58 : vector<8x8x8xf32>
    %60 = arith.addf %53, %59 : vector<8x8x8xf32>
    %c1_70 = arith.constant 1 : index
    %c0_71 = arith.constant 0 : index
    %c0_72 = arith.constant 0 : index
    %61 = vector.load %arg5[%c1_70, %c0_71, %c0_72] : memref<9x1x8xf32, #tpu.memory_space<vmem>>, vector<1x1x8xf32>
    %62 = vector.shape_cast %61 : vector<1x1x8xf32> to vector<1x8xf32>
    %c0_73 = arith.constant 0 : index
    %c1_74 = arith.constant 1 : index
    %c0_75 = arith.constant 0 : index
    %63 = vector.load %arg17[%c0_73, %c1_74, %c0_75] : memref<10x10x8xf32, #tpu.memory_space<vmem>>, vector<8x8x8xf32>
    %64 = vector.shape_cast %62 : vector<1x8xf32> to vector<1x1x8xf32>
    %65 = vector.broadcast %64 : vector<1x1x8xf32> to vector<8x8x8xf32>
    %66 = arith.mulf %63, %65 : vector<8x8x8xf32>
    %67 = arith.addf %60, %66 : vector<8x8x8xf32>
    %c2_76 = arith.constant 2 : index
    %c0_77 = arith.constant 0 : index
    %c0_78 = arith.constant 0 : index
    %68 = vector.load %arg5[%c2_76, %c0_77, %c0_78] : memref<9x1x8xf32, #tpu.memory_space<vmem>>, vector<1x1x8xf32>
    %69 = vector.shape_cast %68 : vector<1x1x8xf32> to vector<1x8xf32>
    %c0_79 = arith.constant 0 : index
    %c2_80 = arith.constant 2 : index
    %c0_81 = arith.constant 0 : index
    %70 = vector.load %arg17[%c0_79, %c2_80, %c0_81] : memref<10x10x8xf32, #tpu.memory_space<vmem>>, vector<8x8x8xf32>
    %71 = vector.shape_cast %69 : vector<1x8xf32> to vector<1x1x8xf32>
    %72 = vector.broadcast %71 : vector<1x1x8xf32> to vector<8x8x8xf32>
    %73 = arith.mulf %70, %72 : vector<8x8x8xf32>
    %74 = arith.addf %67, %73 : vector<8x8x8xf32>
    %c3 = arith.constant 3 : index
    %c0_82 = arith.constant 0 : index
    %c0_83 = arith.constant 0 : index
    %75 = vector.load %arg5[%c3, %c0_82, %c0_83] : memref<9x1x8xf32, #tpu.memory_space<vmem>>, vector<1x1x8xf32>
    %76 = vector.shape_cast %75 : vector<1x1x8xf32> to vector<1x8xf32>
    %c1_84 = arith.constant 1 : index
    %c0_85 = arith.constant 0 : index
    %c0_86 = arith.constant 0 : index
    %77 = vector.load %arg17[%c1_84, %c0_85, %c0_86] : memref<10x10x8xf32, #tpu.memory_space<vmem>>, vector<8x8x8xf32>
    %78 = vector.shape_cast %76 : vector<1x8xf32> to vector<1x1x8xf32>
    %79 = vector.broadcast %78 : vector<1x1x8xf32> to vector<8x8x8xf32>
    %80 = arith.mulf %77, %79 : vector<8x8x8xf32>
    %81 = arith.addf %74, %80 : vector<8x8x8xf32>
    %c4_87 = arith.constant 4 : index
    %c0_88 = arith.constant 0 : index
    %c0_89 = arith.constant 0 : index
    %82 = vector.load %arg5[%c4_87, %c0_88, %c0_89] : memref<9x1x8xf32, #tpu.memory_space<vmem>>, vector<1x1x8xf32>
    %83 = vector.shape_cast %82 : vector<1x1x8xf32> to vector<1x8xf32>
    %c1_90 = arith.constant 1 : index
    %c1_91 = arith.constant 1 : index
    %c0_92 = arith.constant 0 : index
    %84 = vector.load %arg17[%c1_90, %c1_91, %c0_92] : memref<10x10x8xf32, #tpu.memory_space<vmem>>, vector<8x8x8xf32>
    %85 = vector.shape_cast %83 : vector<1x8xf32> to vector<1x1x8xf32>
    %86 = vector.broadcast %85 : vector<1x1x8xf32> to vector<8x8x8xf32>
    %87 = arith.mulf %84, %86 : vector<8x8x8xf32>
    %88 = arith.addf %81, %87 : vector<8x8x8xf32>
    %c5 = arith.constant 5 : index
    %c0_93 = arith.constant 0 : index
    %c0_94 = arith.constant 0 : index
    %89 = vector.load %arg5[%c5, %c0_93, %c0_94] : memref<9x1x8xf32, #tpu.memory_space<vmem>>, vector<1x1x8xf32>
    %90 = vector.shape_cast %89 : vector<1x1x8xf32> to vector<1x8xf32>
    %c1_95 = arith.constant 1 : index
    %c2_96 = arith.constant 2 : index
    %c0_97 = arith.constant 0 : index
    %91 = vector.load %arg17[%c1_95, %c2_96, %c0_97] : memref<10x10x8xf32, #tpu.memory_space<vmem>>, vector<8x8x8xf32>
    %92 = vector.shape_cast %90 : vector<1x8xf32> to vector<1x1x8xf32>
    %93 = vector.broadcast %92 : vector<1x1x8xf32> to vector<8x8x8xf32>
    %94 = arith.mulf %91, %93 : vector<8x8x8xf32>
    %95 = arith.addf %88, %94 : vector<8x8x8xf32>
    %c6 = arith.constant 6 : index
    %c0_98 = arith.constant 0 : index
    %c0_99 = arith.constant 0 : index
    %96 = vector.load %arg5[%c6, %c0_98, %c0_99] : memref<9x1x8xf32, #tpu.memory_space<vmem>>, vector<1x1x8xf32>
    %97 = vector.shape_cast %96 : vector<1x1x8xf32> to vector<1x8xf32>
    %c2_100 = arith.constant 2 : index
    %c0_101 = arith.constant 0 : index
    %c0_102 = arith.constant 0 : index
    %98 = vector.load %arg17[%c2_100, %c0_101, %c0_102] : memref<10x10x8xf32, #tpu.memory_space<vmem>>, vector<8x8x8xf32>
    %99 = vector.shape_cast %97 : vector<1x8xf32> to vector<1x1x8xf32>
    %100 = vector.broadcast %99 : vector<1x1x8xf32> to vector<8x8x8xf32>
    %101 = arith.mulf %98, %100 : vector<8x8x8xf32>
    %102 = arith.addf %95, %101 : vector<8x8x8xf32>
    %c7 = arith.constant 7 : index
    %c0_103 = arith.constant 0 : index
    %c0_104 = arith.constant 0 : index
    %103 = vector.load %arg5[%c7, %c0_103, %c0_104] : memref<9x1x8xf32, #tpu.memory_space<vmem>>, vector<1x1x8xf32>
    %104 = vector.shape_cast %103 : vector<1x1x8xf32> to vector<1x8xf32>
    %c2_105 = arith.constant 2 : index
    %c1_106 = arith.constant 1 : index
    %c0_107 = arith.constant 0 : index
    %105 = vector.load %arg17[%c2_105, %c1_106, %c0_107] : memref<10x10x8xf32, #tpu.memory_space<vmem>>, vector<8x8x8xf32>
    %106 = vector.shape_cast %104 : vector<1x8xf32> to vector<1x1x8xf32>
    %107 = vector.broadcast %106 : vector<1x1x8xf32> to vector<8x8x8xf32>
    %108 = arith.mulf %105, %107 : vector<8x8x8xf32>
    %109 = arith.addf %102, %108 : vector<8x8x8xf32>
    %c8_108 = arith.constant 8 : index
    %c0_109 = arith.constant 0 : index
    %c0_110 = arith.constant 0 : index
    %110 = vector.load %arg5[%c8_108, %c0_109, %c0_110] : memref<9x1x8xf32, #tpu.memory_space<vmem>>, vector<1x1x8xf32>
    %111 = vector.shape_cast %110 : vector<1x1x8xf32> to vector<1x8xf32>
    %c2_111 = arith.constant 2 : index
    %c2_112 = arith.constant 2 : index
    %c0_113 = arith.constant 0 : index
    %112 = vector.load %arg17[%c2_111, %c2_112, %c0_113] : memref<10x10x8xf32, #tpu.memory_space<vmem>>, vector<8x8x8xf32>
    %113 = vector.shape_cast %111 : vector<1x8xf32> to vector<1x1x8xf32>
    %114 = vector.broadcast %113 : vector<1x1x8xf32> to vector<8x8x8xf32>
    %115 = arith.mulf %112, %114 : vector<8x8x8xf32>
    %116 = arith.addf %109, %115 : vector<8x8x8xf32>
    %c0_114 = arith.constant 0 : index
    %c0_115 = arith.constant 0 : index
    %117 = vector.load %arg6[%c0_114, %c0_115] : memref<1x8xf32, #tpu.memory_space<vmem>>, vector<1x8xf32>
    %118 = vector.shape_cast %117 : vector<1x8xf32> to vector<1x1x8xf32>
    %119 = vector.broadcast %118 : vector<1x1x8xf32> to vector<8x8x8xf32>
    %120 = arith.mulf %116, %119 : vector<8x8x8xf32>
    %c0_116 = arith.constant 0 : index
    %c0_117 = arith.constant 0 : index
    %121 = vector.load %arg7[%c0_116, %c0_117] : memref<1x8xf32, #tpu.memory_space<vmem>>, vector<1x8xf32>
    %122 = vector.shape_cast %121 : vector<1x8xf32> to vector<1x1x8xf32>
    %123 = vector.broadcast %122 : vector<1x1x8xf32> to vector<8x8x8xf32>
    %124 = arith.addf %120, %123 : vector<8x8x8xf32>
    %cst_118 = arith.constant 0.000000e+00 : f32
    %125 = vector.broadcast %cst_118 : f32 to vector<8x8x8xf32>
    %126 = arith.maximumf %124, %125 : vector<8x8x8xf32>
    %127 = vector.shape_cast %126 : vector<8x8x8xf32> to vector<64x8xf32>
    %128 = arith.truncf %127 : vector<64x8xf32> to vector<64x8xbf16>
    %c0_119 = arith.constant 0 : index
    %c0_120 = arith.constant 0 : index
    %129 = vector.load %arg11[%c0_119, %c0_120] : memref<8x8xf32, #tpu.memory_space<vmem>>, vector<8x8xf32>
    %130 = arith.truncf %129 : vector<8x8xf32> to vector<8x8xbf16>
    %cst_121 = arith.constant dense<0.000000e+00> : vector<64x8xf32>
    %131 = tpu.matmul %128, %130, %cst_121 {dimension_numbers = #tpu.dot_dimension_numbers<[1], [0], [0], [1], [0, 0, 1, 1], [], []>} : vector<64x8xbf16>, vector<8x8xbf16>, vector<64x8xf32> -> vector<64x8xf32>
    %c0_122 = arith.constant 0 : index
    %c0_123 = arith.constant 0 : index
    %132 = vector.load %arg12[%c0_122, %c0_123] : memref<1x8xf32, #tpu.memory_space<vmem>>, vector<1x8xf32>
    %133 = vector.broadcast %132 : vector<1x8xf32> to vector<64x8xf32>
    %134 = arith.mulf %131, %133 : vector<64x8xf32>
    %c0_124 = arith.constant 0 : index
    %c0_125 = arith.constant 0 : index
    %135 = vector.load %arg13[%c0_124, %c0_125] : memref<1x8xf32, #tpu.memory_space<vmem>>, vector<1x8xf32>
    %136 = vector.broadcast %135 : vector<1x8xf32> to vector<64x8xf32>
    %137 = arith.addf %134, %136 : vector<64x8xf32>
    %cst_126 = arith.constant 0.000000e+00 : f32
    %138 = vector.broadcast %cst_126 : f32 to vector<64x8xf32>
    %139 = arith.maximumf %137, %138 : vector<64x8xf32>
    %140 = vector.shape_cast %139 : vector<64x8xf32> to vector<8x8x8xf32>
    %c0_127 = arith.constant 0 : index
    %c0_128 = arith.constant 0 : index
    %c0_129 = arith.constant 0 : index
    %c0_130 = arith.constant 0 : index
    %141 = vector.load %arg14[%c0_127, %c0_128, %c0_129, %c0_130] : memref<1x8x8x8xf32, #tpu.memory_space<vmem>>, vector<1x8x8x8xf32>
    %142 = vector.shape_cast %141 : vector<1x8x8x8xf32> to vector<8x8x8xf32>
    %143 = vector.shape_cast %140 : vector<8x8x8xf32> to vector<1x8x8x8xf32>
    tpu.vector_store %arg14[%c0_127, %c0_128, %c0_129, %c0_130], %143 {strides = array<i32>} : memref<1x8x8x8xf32, #tpu.memory_space<vmem>>, vector<1x8x8x8xf32>,
    return
  }
  func.func @transform_0(%arg0: i32) -> (i32, i32, i32, i32) {
    %c0_i32 = arith.constant 0 : i32
    %c0_i32_0 = arith.constant 0 : i32
    %c0_i32_1 = arith.constant 0 : i32
    %c0_i32_2 = arith.constant 0 : i32
    return %arg0, %c0_i32, %c0_i32_0, %c0_i32_1 : i32, i32, i32, i32
  }
  func.func @transform_1(%arg0: i32) -> (i32, i32) {
    %c0_i32 = arith.constant 0 : i32
    %c0_i32_0 = arith.constant 0 : i32
    %c0_i32_1 = arith.constant 0 : i32
    return %c0_i32, %c0_i32_0 : i32, i32
  }
  func.func @transform_2(%arg0: i32) -> (i32, i32) {
    %c0_i32 = arith.constant 0 : i32
    %c0_i32_0 = arith.constant 0 : i32
    %c0_i32_1 = arith.constant 0 : i32
    return %c0_i32, %c0_i32_0 : i32, i32
  }
  func.func @transform_3(%arg0: i32) -> (i32, i32) {
    %c0_i32 = arith.constant 0 : i32
    %c0_i32_0 = arith.constant 0 : i32
    %c0_i32_1 = arith.constant 0 : i32
    return %c0_i32, %c0_i32_0 : i32, i32
  }
  func.func @transform_4(%arg0: i32) -> (i32, i32, i32) {
    %c0_i32 = arith.constant 0 : i32
    %c0_i32_0 = arith.constant 0 : i32
    %c0_i32_1 = arith.constant 0 : i32
    %c0_i32_2 = arith.constant 0 : i32
    return %c0_i32, %c0_i32_0, %c0_i32_1 : i32, i32, i32
  }
  func.func @transform_5(%arg0: i32) -> (i32, i32) {
    %c0_i32 = arith.constant 0 : i32
    %c0_i32_0 = arith.constant 0 : i32
    %c0_i32_1 = arith.constant 0 : i32
    return %c0_i32, %c0_i32_0 : i32, i32
  }
  func.func @transform_6(%arg0: i32) -> (i32, i32) {
    %c0_i32 = arith.constant 0 : i32
    %c0_i32_0 = arith.constant 0 : i32
    %c0_i32_1 = arith.constant 0 : i32
    return %c0_i32, %c0_i32_0 : i32, i32
  }
  func.func @transform_7(%arg0: i32) -> (i32, i32, i32) {
    %c0_i32 = arith.constant 0 : i32
    %c0_i32_0 = arith.constant 0 : i32
    %c0_i32_1 = arith.constant 0 : i32
    %c0_i32_2 = arith.constant 0 : i32
    return %c0_i32, %c0_i32_0, %c0_i32_1 : i32, i32, i32
  }
  func.func @transform_8(%arg0: i32) -> (i32, i32) {
    %c0_i32 = arith.constant 0 : i32
    %c0_i32_0 = arith.constant 0 : i32
    %c0_i32_1 = arith.constant 0 : i32
    return %c0_i32, %c0_i32_0 : i32, i32
  }
  func.func @transform_9(%arg0: i32) -> (i32, i32) {
    %c0_i32 = arith.constant 0 : i32
    %c0_i32_0 = arith.constant 0 : i32
    %c0_i32_1 = arith.constant 0 : i32
    return %c0_i32, %c0_i32_0 : i32, i32
  }
  func.func @transform_10(%arg0: i32) -> (i32, i32) {
    %c0_i32 = arith.constant 0 : i32
    %c0_i32_0 = arith.constant 0 : i32
    %c0_i32_1 = arith.constant 0 : i32
    return %c0_i32, %c0_i32_0 : i32, i32
  }
  func.func @transform_11(%arg0: i32) -> (i32, i32) {
    %c0_i32 = arith.constant 0 : i32
    %c0_i32_0 = arith.constant 0 : i32
    %c0_i32_1 = arith.constant 0 : i32
    return %c0_i32, %c0_i32_0 : i32, i32
  }
  func.func @transform_12(%arg0: i32) -> (i32, i32) {
    %c0_i32 = arith.constant 0 : i32
    %c0_i32_0 = arith.constant 0 : i32
    %c0_i32_1 = arith.constant 0 : i32
    return %c0_i32, %c0_i32_0 : i32, i32
  }
  func.func @transform_13(%arg0: i32) -> (i32, i32, i32, i32) {
    %c0_i32 = arith.constant 0 : i32
    %c0_i32_0 = arith.constant 0 : i32
    %c0_i32_1 = arith.constant 0 : i32
    %c0_i32_2 = arith.constant 0 : i32
    return %arg0, %c0_i32, %c0_i32_0, %c0_i32_1 : i32, i32, i32, i32
  }
}

</mosaic_0001>

<llo_original>
// kernel: tpu_custom_call.1
$region0: #{tpu_custom_call.1}
  #allocation0 [shape = 'u32[]', space=smem, size = 0x4, offset = 0x4, fixed_abs, tag = 'smem constant byte address 0x4 - core index']
  #allocation1 [shape = 'u32[72,128]{1,0:T(1,128)}', space=vmem, size = 0x9000, scoped, tag = 'internal scratch']
  #allocation2 [shape = 'f32[10,10,4]{2,1,0:T(8,128)}', space=vmem, size = 0x14000, scoped, tag = 'scratch operand']
  #allocation3 [shape = 'f32[64,36]{1,0:T(8,128)}', space=vmem, size = 0x8000, scoped, tag = 'scratch operand']
  #allocation4 [shape = 'f32[10,10,8]{2,1,0:T(8,128)}', space=vmem, size = 0x14000, scoped, tag = 'scratch operand']
  %s0 = inlined_call_operand.vmem [shape: f32[2,16,16,4], index: 0, kind: input, shape index: {}]
  %s1 = inlined_call_operand.vmem [shape: f32[36,8], index: 1, kind: input, shape index: {}]
  %s2 = inlined_call_operand.vmem [shape: f32[1,8], index: 2, kind: input, shape index: {}]
  %s3 = inlined_call_operand.vmem [shape: f32[1,8], index: 3, kind: input, shape index: {}]
  %s4 = inlined_call_operand.vmem [shape: f32[9,1,8], index: 4, kind: input, shape index: {}]
  %s5 = inlined_call_operand.vmem [shape: f32[1,8], index: 5, kind: input, shape index: {}]
  %s6 = inlined_call_operand.vmem [shape: f32[1,8], index: 6, kind: input, shape index: {}]
  %s7 = inlined_call_operand.vmem [shape: f32[9,1,8], index: 7, kind: input, shape index: {}]
  %s8 = inlined_call_operand.vmem [shape: f32[1,8], index: 8, kind: input, shape index: {}]
  %s9 = inlined_call_operand.vmem [shape: f32[1,8], index: 9, kind: input, shape index: {}]
  %s10 = inlined_call_operand.vmem [shape: f32[8,8], index: 10, kind: input, shape index: {}]
  %s11 = inlined_call_operand.vmem [shape: f32[1,8], index: 11, kind: input, shape index: {}]
  %s12 = inlined_call_operand.vmem [shape: f32[1,8], index: 12, kind: input, shape index: {}]
  %s13 = inlined_call_operand.hbm [shape: f32[2,8,8,8], index: 13, kind: output, shape index: {}]
  %s14 = sld [smem:[#allocation0]]
  $region85: #{tpu_custom_call.1} parent=0
    _
  %s16 = ssub.s32 1, %s14
  %s17 = scalar_select 0, %s16, %s14
  $region1: #{tpu_custom_call.1} parent=0
    #allocation5 [shape = 'u8[65536]{0}', space=vmem, size = 0x10000, scoped, tag = 'output window, operand 0']
    #allocation6 [shape = 's32[2]{0}', space=sflag, size = 0x8, scoped, tag = 'scoped memory for tpu_custom_call.1']
    %18 = vsyncpa [#allocation6], 0
    %s19 = scalar_lea.sflag [#allocation6], 1
    %20 = vsyncpa %s19, 0
    loop: start=0, step=1, limit=4
    $region2: #{tpu_custom_call.1} parent=1 // loop_pre_header
      _
    $region3: #{tpu_custom_call.1} parent=1 // loop_header
      %s22 = sphi 0, %s26
      %p23 = scmp.ge.s32.totalorder %s22, 4
      %s32 = sphi 0, %s34
      %s35 = sphi 0, %s32
      %s36 = sphi 0, %s35
      %s52 = sphi 0, %s36
      %s56 = sphi 0, %s56
      %s58 = sphi 0, %s56
      %s59 = sphi 0, %s58
      %s73 = sphi 0, %s59
      %s77 = sphi 0, %s77
      %s79 = sphi 0, %s77
      %s80 = sphi 0, %s79
      %s94 = sphi 0, %s80
      %s98 = sphi 0, %s98
      %s100 = sphi 0, %s98
      %s101 = sphi 0, %s100
      %s115 = sphi 0, %s101
      %s119 = sphi 0, %s119
      %s121 = sphi 0, %s119
      %s122 = sphi 0, %s121
      %s136 = sphi 0, %s122
      %s140 = sphi 0, %s140
      %s142 = sphi 0, %s140
      %s143 = sphi 0, %s142
      %s157 = sphi 0, %s143
      %s161 = sphi 0, %s161
      %s163 = sphi 0, %s161
      %s164 = sphi 0, %s163
      %s178 = sphi 0, %s164
      %s182 = sphi 0, %s182
      %s184 = sphi 0, %s182
      %s185 = sphi 0, %s184
      %s199 = sphi 0, %s185
      %s203 = sphi 0, %s203
      %s205 = sphi 0, %s203
      %s206 = sphi 0, %s205
      %s220 = sphi 0, %s206
      %s224 = sphi 0, %s224
      %s226 = sphi 0, %s224
      %s227 = sphi 0, %s226
      %s241 = sphi 0, %s227
      %s245 = sphi 0, %s245
      %s247 = sphi 0, %s245
      %s248 = sphi 0, %s247
      %s262 = sphi 0, %s248
      %s266 = sphi 0, %s266
      %s268 = sphi 0, %s266
      %s269 = sphi 0, %s268
      %s283 = sphi 0, %s269
      %s287 = sphi 0, %s287
      %s289 = sphi 0, %s287
      %s290 = sphi 0, %s289
      %s304 = sphi 0, %s290
      %s310 = sphi 0, %s312
      %s313 = sphi 0, %s310
      %s314 = sphi 0, %s313
      %s330 = sphi 0, %s314
    $region4: #{tpu_custom_call.1} parent=1 // loop_header_branch
      %25 = sbr.rel (%p23) target = $region8
    $region5: #{tpu_custom_call.1} parent=1 // loop_body
      %s27 = ssub.s32 %s22, 1
      %s28 = ssub.s32 %s22, 2
      %s29 = sadd.s32 %s22, 1
      %s30 = ssub.s32 %s22, %s29
      %p31 = scmp.eq.s32.totalorder %s30, 0
      %s33 = sadd.s32 %s32, 1
      %s34 = scalar_select %p31, %s32, %s33
      %p37 = pneg %p31
      %p38 = scmp.eq.s32.totalorder %s22, 1
      %p39 = por %p37, %p38
      %p40 = scmp.ne.s32.totalorder %s32, %s35
      %p41 = scmp.eq.s32.totalorder %s22, 0
      %p42 = por %p40, %p41
      %p43 = scmp.ne.s32.totalorder %s32, %s35
      %p44 = scmp.eq.s32.totalorder %s27, 1
      %p45 = por %p43, %p44
      %p46 = scmp.ne.s32.totalorder %s35, %s36
      %p47 = scmp.eq.s32.totalorder %s27, 0
      %p48 = por %p46, %p47
      %p49 = scmp.ne.s32.totalorder %s35, %s36
      %p50 = scmp.eq.s32.totalorder %s28, 1
      %p51 = por %p49, %p50
      %p53 = scmp.ne.s32.totalorder %s36, %s52
      %p54 = scmp.eq.s32.totalorder %s28, 0
      %p55 = por %p53, %p54
      %s57 = sadd.s32 %s56, 1
      %p60 = scmp.eq.s32.totalorder %s22, 1
      %p61 = scmp.ne.s32.totalorder %s56, %s58
      %p62 = scmp.eq.s32.totalorder %s22, 0
      %p63 = por %p61, %p62
      %p64 = scmp.ne.s32.totalorder %s56, %s58
      %p65 = scmp.eq.s32.totalorder %s27, 1
      %p66 = por %p64, %p65
      %p67 = scmp.ne.s32.totalorder %s58, %s59
      %p68 = scmp.eq.s32.totalorder %s27, 0
      %p69 = por %p67, %p68
      %p70 = scmp.ne.s32.totalorder %s58, %s59
      %p71 = scmp.eq.s32.totalorder %s28, 1
      %p72 = por %p70, %p71
      %p74 = scmp.ne.s32.totalorder %s59, %s73
      %p75 = scmp.eq.s32.totalorder %s28, 0
      %p76 = por %p74, %p75
      %s78 = sadd.s32 %s77, 1
      %p81 = scmp.eq.s32.totalorder %s22, 1
      %p82 = scmp.ne.s32.totalorder %s77, %s79
      %p83 = scmp.eq.s32.totalorder %s22, 0
      %p84 = por %p82, %p83
      %p85 = scmp.ne.s32.totalorder %s77, %s79
      %p86 = scmp.eq.s32.totalorder %s27, 1
      %p87 = por %p85, %p86
      %p88 = scmp.ne.s32.totalorder %s79, %s80
      %p89 = scmp.eq.s32.totalorder %s27, 0
      %p90 = por %p88, %p89
      %p91 = scmp.ne.s32.totalorder %s79, %s80
      %p92 = scmp.eq.s32.totalorder %s28, 1
      %p93 = por %p91, %p92
      %p95 = scmp.ne.s32.totalorder %s80, %s94
      %p96 = scmp.eq.s32.totalorder %s28, 0
      %p97 = por %p95, %p96
      %s99 = sadd.s32 %s98, 1
      %p102 = scmp.eq.s32.totalorder %s22, 1
      %p103 = scmp.ne.s32.totalorder %s98, %s100
      %p104 = scmp.eq.s32.totalorder %s22, 0
      %p105 = por %p103, %p104
      %p106 = scmp.ne.s32.totalorder %s98, %s100
      %p107 = scmp.eq.s32.totalorder %s27, 1
      %p108 = por %p106, %p107
      %p109 = scmp.ne.s32.totalorder %s100, %s101
      %p110 = scmp.eq.s32.totalorder %s27, 0
      %p111 = por %p109, %p110
      %p112 = scmp.ne.s32.totalorder %s100, %s101
      %p113 = scmp.eq.s32.totalorder %s28, 1
      %p114 = por %p112, %p113
      %p116 = scmp.ne.s32.totalorder %s101, %s115
      %p117 = scmp.eq.s32.totalorder %s28, 0
      %p118 = por %p116, %p117
      %s120 = sadd.s32 %s119, 1
      %p123 = scmp.eq.s32.totalorder %s22, 1
      %p124 = scmp.ne.s32.totalorder %s119, %s121
      %p125 = scmp.eq.s32.totalorder %s22, 0
      %p126 = por %p124, %p125
      %p127 = scmp.ne.s32.totalorder %s119, %s121
      %p128 = scmp.eq.s32.totalorder %s27, 1
      %p129 = por %p127, %p128
      %p130 = scmp.ne.s32.totalorder %s121, %s122
      %p131 = scmp.eq.s32.totalorder %s27, 0
      %p132 = por %p130, %p131
      %p133 = scmp.ne.s32.totalorder %s121, %s122
      %p134 = scmp.eq.s32.totalorder %s28, 1
      %p135 = por %p133, %p134
      %p137 = scmp.ne.s32.totalorder %s122, %s136
      %p138 = scmp.eq.s32.totalorder %s28, 0
      %p139 = por %p137, %p138
      %s141 = sadd.s32 %s140, 1
      %p144 = scmp.eq.s32.totalorder %s22, 1
      %p145 = scmp.ne.s32.totalorder %s140, %s142
      %p146 = scmp.eq.s32.totalorder %s22, 0
      %p147 = por %p145, %p146
      %p148 = scmp.ne.s32.totalorder %s140, %s142
      %p149 = scmp.eq.s32.totalorder %s27, 1
      %p150 = por %p148, %p149
      %p151 = scmp.ne.s32.totalorder %s142, %s143
      %p152 = scmp.eq.s32.totalorder %s27, 0
      %p153 = por %p151, %p152
      %p154 = scmp.ne.s32.totalorder %s142, %s143
      %p155 = scmp.eq.s32.totalorder %s28, 1
      %p156 = por %p154, %p155
      %p158 = scmp.ne.s32.totalorder %s143, %s157
      %p159 = scmp.eq.s32.totalorder %s28, 0
      %p160 = por %p158, %p159
      %s162 = sadd.s32 %s161, 1
      %p165 = scmp.eq.s32.totalorder %s22, 1
      %p166 = scmp.ne.s32.totalorder %s161, %s163
      %p167 = scmp.eq.s32.totalorder %s22, 0
      %p168 = por %p166, %p167
      %p169 = scmp.ne.s32.totalorder %s161, %s163
      %p170 = scmp.eq.s32.totalorder %s27, 1
      %p171 = por %p169, %p170
      %p172 = scmp.ne.s32.totalorder %s163, %s164
      %p173 = scmp.eq.s32.totalorder %s27, 0
      %p174 = por %p172, %p173
      %p175 = scmp.ne.s32.totalorder %s163, %s164
      %p176 = scmp.eq.s32.totalorder %s28, 1
      %p177 = por %p175, %p176
      %p179 = scmp.ne.s32.totalorder %s164, %s178
      %p180 = scmp.eq.s32.totalorder %s28, 0
      %p181 = por %p179, %p180
      %s183 = sadd.s32 %s182, 1
      %p186 = scmp.eq.s32.totalorder %s22, 1
      %p187 = scmp.ne.s32.totalorder %s182, %s184
      %p188 = scmp.eq.s32.totalorder %s22, 0
      %p189 = por %p187, %p188
      %p190 = scmp.ne.s32.totalorder %s182, %s184
      %p191 = scmp.eq.s32.totalorder %s27, 1
      %p192 = por %p190, %p191
      %p193 = scmp.ne.s32.totalorder %s184, %s185
      %p194 = scmp.eq.s32.totalorder %s27, 0
      %p195 = por %p193, %p194
      %p196 = scmp.ne.s32.totalorder %s184, %s185
      %p197 = scmp.eq.s32.totalorder %s28, 1
      %p198 = por %p196, %p197
      %p200 = scmp.ne.s32.totalorder %s185, %s199
      %p201 = scmp.eq.s32.totalorder %s28, 0
      %p202 = por %p200, %p201
      %s204 = sadd.s32 %s203, 1
      %p207 = scmp.eq.s32.totalorder %s22, 1
      %p208 = scmp.ne.s32.totalorder %s203, %s205
      %p209 = scmp.eq.s32.totalorder %s22, 0
      %p210 = por %p208, %p209
      %p211 = scmp.ne.s32.totalorder %s203, %s205
      %p212 = scmp.eq.s32.totalorder %s27, 1
      %p213 = por %p211, %p212
      %p214 = scmp.ne.s32.totalorder %s205, %s206
      %p215 = scmp.eq.s32.totalorder %s27, 0
      %p216 = por %p214, %p215
      %p217 = scmp.ne.s32.totalorder %s205, %s206
      %p218 = scmp.eq.s32.totalorder %s28, 1
      %p219 = por %p217, %p218
      %p221 = scmp.ne.s32.totalorder %s206, %s220
      %p222 = scmp.eq.s32.totalorder %s28, 0
      %p223 = por %p221, %p222
      %s225 = sadd.s32 %s224, 1
      %p228 = scmp.eq.s32.totalorder %s22, 1
      %p229 = scmp.ne.s32.totalorder %s224, %s226
      %p230 = scmp.eq.s32.totalorder %s22, 0
      %p231 = por %p229, %p230
      %p232 = scmp.ne.s32.totalorder %s224, %s226
      %p233 = scmp.eq.s32.totalorder %s27, 1
      %p234 = por %p232, %p233
      %p235 = scmp.ne.s32.totalorder %s226, %s227
      %p236 = scmp.eq.s32.totalorder %s27, 0
      %p237 = por %p235, %p236
      %p238 = scmp.ne.s32.totalorder %s226, %s227
      %p239 = scmp.eq.s32.totalorder %s28, 1
      %p240 = por %p238, %p239
      %p242 = scmp.ne.s32.totalorder %s227, %s241
      %p243 = scmp.eq.s32.totalorder %s28, 0
      %p244 = por %p242, %p243
      %s246 = sadd.s32 %s245, 1
      %p249 = scmp.eq.s32.totalorder %s22, 1
      %p250 = scmp.ne.s32.totalorder %s245, %s247
      %p251 = scmp.eq.s32.totalorder %s22, 0
      %p252 = por %p250, %p251
      %p253 = scmp.ne.s32.totalorder %s245, %s247
      %p254 = scmp.eq.s32.totalorder %s27, 1
      %p255 = por %p253, %p254
      %p256 = scmp.ne.s32.totalorder %s247, %s248
      %p257 = scmp.eq.s32.totalorder %s27, 0
      %p258 = por %p256, %p257
      %p259 = scmp.ne.s32.totalorder %s247, %s248
      %p260 = scmp.eq.s32.totalorder %s28, 1
      %p261 = por %p259, %p260
      %p263 = scmp.ne.s32.totalorder %s248, %s262
      %p264 = scmp.eq.s32.totalorder %s28, 0
      %p265 = por %p263, %p264
      %s267 = sadd.s32 %s266, 1
      %p270 = scmp.eq.s32.totalorder %s22, 1
      %p271 = scmp.ne.s32.totalorder %s266, %s268
      %p272 = scmp.eq.s32.totalorder %s22, 0
      %p273 = por %p271, %p272
      %p274 = scmp.ne.s32.totalorder %s266, %s268
      %p275 = scmp.eq.s32.totalorder %s27, 1
      %p276 = por %p274, %p275
      %p277 = scmp.ne.s32.totalorder %s268, %s269
      %p278 = scmp.eq.s32.totalorder %s27, 0
      %p279 = por %p277, %p278
      %p280 = scmp.ne.s32.totalorder %s268, %s269
      %p281 = scmp.eq.s32.totalorder %s28, 1
      %p282 = por %p280, %p281
      %p284 = scmp.ne.s32.totalorder %s269, %s283
      %p285 = scmp.eq.s32.totalorder %s28, 0
      %p286 = por %p284, %p285
      %s288 = sadd.s32 %s287, 1
      %p291 = scmp.eq.s32.totalorder %s22, 1
      %p292 = scmp.ne.s32.totalorder %s287, %s289
      %p293 = scmp.eq.s32.totalorder %s22, 0
      %p294 = por %p292, %p293
      %p295 = scmp.ne.s32.totalorder %s287, %s289
      %p296 = scmp.eq.s32.totalorder %s27, 1
      %p297 = por %p295, %p296
      %p298 = scmp.ne.s32.totalorder %s289, %s290
      %p299 = scmp.eq.s32.totalorder %s27, 0
      %p300 = por %p298, %p299
      %p301 = scmp.ne.s32.totalorder %s289, %s290
      %p302 = scmp.eq.s32.totalorder %s28, 1
      %p303 = por %p301, %p302
      %p305 = scmp.ne.s32.totalorder %s290, %s304
      %p306 = scmp.eq.s32.totalorder %s28, 0
      %p307 = por %p305, %p306
      %s308 = ssub.s32 %s22, %s29
      %p309 = scmp.eq.s32.totalorder %s308, 0
      %s311 = sadd.s32 %s310, 1
      %s312 = scalar_select %p309, %s310, %s311
      %p315 = pneg %p309
      %p316 = scmp.eq.s32.totalorder %s22, 1
      %p317 = por %p315, %p316
      %p318 = scmp.ne.s32.totalorder %s310, %s313
      %p319 = scmp.eq.s32.totalorder %s22, 0
      %p320 = por %p318, %p319
      %p321 = scmp.ne.s32.totalorder %s310, %s313
      %p322 = scmp.eq.s32.totalorder %s27, 1
      %p323 = por %p321, %p322
      %p324 = scmp.ne.s32.totalorder %s313, %s314
      %p325 = scmp.eq.s32.totalorder %s27, 0
      %p326 = por %p324, %p325
      %p327 = scmp.ne.s32.totalorder %s313, %s314
      %p328 = scmp.eq.s32.totalorder %s28, 1
      %p329 = por %p327, %p328
      %p331 = scmp.ne.s32.totalorder %s314, %s330
      %p332 = scmp.eq.s32.totalorder %s28, 0
      %p333 = por %p331, %p332
      %p334 = scmp.le.s32.totalorder 1, %s22
      %p335 = scmp.lt.s32.totalorder %s22, 3
      %p336 = pnand %p334, %p335
      %p337 = pneg %p336
      // Predicated region
      $region9: #{tpu_custom_call.1} parent=5 // pred_check
        _
      $region10: #{tpu_custom_call.1} parent=5 // pred_check_branch
        %339 = sbr.rel (%p336) target = $region12
      $region11: #{tpu_custom_call.1} parent=5 // pred_region
        %s340 = ssub.s32 %s22, 1
        // Predicated region
        $region13: #{tpu_custom_call.1} parent=11 // pred_check
          %p341 = pneg %p69
        $region14: #{tpu_custom_call.1} parent=11 // pred_check_branch
          %343 = sbr.rel (%p341) target = $region16
        $region15: #{tpu_custom_call.1} parent=11 // pred_region
          _
        $region16: #{tpu_custom_call.1} parent=11 // pred_fallthru
          _
        // Predicated region
        $region17: #{tpu_custom_call.1} parent=11 // pred_check
          %p344 = pneg %p90
        $region18: #{tpu_custom_call.1} parent=11 // pred_check_branch
          %346 = sbr.rel (%p344) target = $region20
        $region19: #{tpu_custom_call.1} parent=11 // pred_region
          _
        $region20: #{tpu_custom_call.1} parent=11 // pred_fallthru
          _
        // Predicated region
        $region21: #{tpu_custom_call.1} parent=11 // pred_check
          %p347 = pneg %p111
        $region22: #{tpu_custom_call.1} parent=11 // pred_check_branch
          %349 = sbr.rel (%p347) target = $region24
        $region23: #{tpu_custom_call.1} parent=11 // pred_region
          _
        $region24: #{tpu_custom_call.1} parent=11 // pred_fallthru
          _
        // Predicated region
        $region25: #{tpu_custom_call.1} parent=11 // pred_check
          %p350 = pneg %p132
        $region26: #{tpu_custom_call.1} parent=11 // pred_check_branch
          %352 = sbr.rel (%p350) target = $region28
        $region27: #{tpu_custom_call.1} parent=11 // pred_region
          _
        $region28: #{tpu_custom_call.1} parent=11 // pred_fallthru
          _
        // Predicated region
        $region29: #{tpu_custom_call.1} parent=11 // pred_check
          %p353 = pneg %p153
        $region30: #{tpu_custom_call.1} parent=11 // pred_check_branch
          %355 = sbr.rel (%p353) target = $region32
        $region31: #{tpu_custom_call.1} parent=11 // pred_region
          _
        $region32: #{tpu_custom_call.1} parent=11 // pred_fallthru
          _
        // Predicated region
        $region33: #{tpu_custom_call.1} parent=11 // pred_check
          %p356 = pneg %p174
        $region34: #{tpu_custom_call.1} parent=11 // pred_check_branch
          %358 = sbr.rel (%p356) target = $region36
        $region35: #{tpu_custom_call.1} parent=11 // pred_region
          _
        $region36: #{tpu_custom_call.1} parent=11 // pred_fallthru
          _
        // Predicated region
        $region37: #{tpu_custom_call.1} parent=11 // pred_check
          %p359 = pneg %p195
        $region38: #{tpu_custom_call.1} parent=11 // pred_check_branch
          %361 = sbr.rel (%p359) target = $region40
        $region39: #{tpu_custom_call.1} parent=11 // pred_region
          _
        $region40: #{tpu_custom_call.1} parent=11 // pred_fallthru
          _
        // Predicated region
        $region41: #{tpu_custom_call.1} parent=11 // pred_check
          %p362 = pneg %p216
        $region42: #{tpu_custom_call.1} parent=11 // pred_check_branch
          %364 = sbr.rel (%p362) target = $region44
        $region43: #{tpu_custom_call.1} parent=11 // pred_region
          _
        $region44: #{tpu_custom_call.1} parent=11 // pred_fallthru
          _
        // Predicated region
        $region45: #{tpu_custom_call.1} parent=11 // pred_check
          %p365 = pneg %p237
        $region46: #{tpu_custom_call.1} parent=11 // pred_check_branch
          %367 = sbr.rel (%p365) target = $region48
        $region47: #{tpu_custom_call.1} parent=11 // pred_region
          _
        $region48: #{tpu_custom_call.1} parent=11 // pred_fallthru
          _
        // Predicated region
        $region49: #{tpu_custom_call.1} parent=11 // pred_check
          %p368 = pneg %p258
        $region50: #{tpu_custom_call.1} parent=11 // pred_check_branch
          %370 = sbr.rel (%p368) target = $region52
        $region51: #{tpu_custom_call.1} parent=11 // pred_region
          _
        $region52: #{tpu_custom_call.1} parent=11 // pred_fallthru
          _
        // Predicated region
        $region53: #{tpu_custom_call.1} parent=11 // pred_check
          %p371 = pneg %p279
        $region54: #{tpu_custom_call.1} parent=11 // pred_check_branch
          %373 = sbr.rel (%p371) target = $region56
        $region55: #{tpu_custom_call.1} parent=11 // pred_region
          _
        $region56: #{tpu_custom_call.1} parent=11 // pred_fallthru
          _
        // Predicated region
        $region57: #{tpu_custom_call.1} parent=11 // pred_check
          %p374 = pneg %p300
        $region58: #{tpu_custom_call.1} parent=11 // pred_check_branch
          %376 = sbr.rel (%p374) target = $region60
        $region59: #{tpu_custom_call.1} parent=11 // pred_region
          _
        $region60: #{tpu_custom_call.1} parent=11 // pred_fallthru
          _
      $region12: #{tpu_custom_call.1} parent=5 // pred_fallthru
        _
      %p377 = scmp.lt.s32.totalorder %s22, 2
      // Predicated region
      $region61: #{tpu_custom_call.1} parent=5 // pred_check
        %p378 = pneg %p377
      $region62: #{tpu_custom_call.1} parent=5 // pred_check_branch
        %380 = sbr.rel (%p378) target = $region64
      $region63: #{tpu_custom_call.1} parent=5 // pred_region
        // Predicated region
        $region65: #{tpu_custom_call.1} parent=63 // pred_check
          %p381 = pneg %p42
        $region66: #{tpu_custom_call.1} parent=63 // pred_check_branch
          %383 = sbr.rel (%p381) target = $region68
        $region67: #{tpu_custom_call.1} parent=63 // pred_region
          %p384 = scmp.lt.s32.totalorder %s22, 1
          %s385 = scalar_select %p384, %s22, 1
          %s386 = smul.addr %s385, 32
          %s387 = smul.addr %s386, 8
          %s388 = scalar_lea.vmem %s0, %s387
        $region68: #{tpu_custom_call.1} parent=63 // pred_fallthru
          _
      $region64: #{tpu_custom_call.1} parent=5 // pred_fallthru
        _
      %p389 = scmp.le.s32.totalorder 1, %s22
      %p390 = scmp.lt.s32.totalorder %s22, 3
      %p391 = pnand %p389, %p390
      %p392 = pneg %p391
      // Predicated region
      $region69: #{tpu_custom_call.1} parent=5 // pred_check
        _
      $region70: #{tpu_custom_call.1} parent=5 // pred_check_branch
        %394 = sbr.rel (%p391) target = $region72
      $region71: #{tpu_custom_call.1} parent=5 // pred_region
        %s395 = ssub.s32 %s22, 1
        %p396 = scmp.lt.s32.totalorder %s27, 1
        %s397 = scalar_select %p396, %s27, 1
        %s398 = smul.addr %s397, 32
        %s399 = smul.addr %s398, 8
        %s400 = scalar_lea.vmem %s0, %s399
        %p401 = pneg %p48
        %p402 = pneg %p45
        %p403 = pneg %p69
        %p404 = pneg %p66
        %p405 = pneg %p90
        %p406 = pneg %p87
        %p407 = pneg %p111
        %p408 = pneg %p108
        %p409 = pneg %p132
        %p410 = pneg %p129
        %p411 = pneg %p153
        %p412 = pneg %p150
        %p413 = pneg %p174
        %p414 = pneg %p171
        %p415 = pneg %p195
        %p416 = pneg %p192
        %p417 = pneg %p216
        %p418 = pneg %p213
        %p419 = pneg %p237
        %p420 = pneg %p234
        %p421 = pneg %p258
        %p422 = pneg %p255
        %p423 = pneg %p279
        %p424 = pneg %p276
        %p425 = pneg %p300
        %p426 = pneg %p297
        %p427 = pneg %p326
        %p428 = pneg %p323
        %s429 = sand.u32 %s313, 1
        %s430 = scalar_lea.sflag [#allocation6], %s429
        %s431 = sand.u32 %s313, 1
        %s432 = smul.addr %s431, 64
        %s433 = scalar_lea.vmem [#allocation5], %s432
        %p434 = scmp.lt.s32.totalorder %s27, 1
        %s435 = scalar_select %p434, %s27, 1
        %s436 = smul.addr %s435, 32
        %s437 = smul.addr %s436, 8
        %s438 = scalar_lea.vmem %s0, %s437
        %v440 = vld [vmem:[%s438] sm:$0xff]
        %v441 = vld [vmem:[%s438 + $0x8] sm:$0xff]
        %v442 = vld [vmem:[%s438 + $0x10] sm:$0xff]
        %v443 = vld [vmem:[%s438 + $0x18] sm:$0xff]
        %v444 = vld [vmem:[%s438 + $0x20] sm:$0xff]
        %v445 = vld [vmem:[%s438 + $0x28] sm:$0xff]
        %v446 = vld [vmem:[%s438 + $0x30] sm:$0xff]
        %v447 = vld [vmem:[%s438 + $0x38] sm:$0xff]
        %v448 = vld [vmem:[%s438 + $0x40] sm:$0xff]
        %v449 = vld [vmem:[%s438 + $0x48] sm:$0xff]
        %v450 = vld [vmem:[%s438 + $0x50] sm:$0xff]
        %v451 = vld [vmem:[%s438 + $0x58] sm:$0xff]
        %v452 = vld [vmem:[%s438 + $0x60] sm:$0xff]
        %v453 = vld [vmem:[%s438 + $0x68] sm:$0xff]
        %v454 = vld [vmem:[%s438 + $0x70] sm:$0xff]
        %v455 = vld [vmem:[%s438 + $0x78] sm:$0xff]
        %v456 = vld [vmem:[%s438 + $0x80] sm:$0xff]
        %v457 = vld [vmem:[%s438 + $0x88] sm:$0xff]
        %v458 = vld [vmem:[%s438 + $0x90] sm:$0xff]
        %v459 = vld [vmem:[%s438 + $0x98] sm:$0xff]
        %v460 = vld [vmem:[%s438 + $0xa0] sm:$0xff]
        %v461 = vld [vmem:[%s438 + $0xa8] sm:$0xff]
        %v462 = vld [vmem:[%s438 + $0xb0] sm:$0xff]
        %v463 = vld [vmem:[%s438 + $0xb8] sm:$0xff]
        %v464 = vld [vmem:[%s438 + $0xc0] sm:$0xff]
        %v465 = vld [vmem:[%s438 + $0xc8] sm:$0xff]
        %v466 = vld [vmem:[%s438 + $0xd0] sm:$0xff]
        %v467 = vld [vmem:[%s438 + $0xd8] sm:$0xff]
        %v468 = vld [vmem:[%s438 + $0xe0] sm:$0xff]
        %v469 = vld [vmem:[%s438 + $0xe8] sm:$0xff]
        %v470 = vld [vmem:[%s438 + $0xf0] sm:$0xff]
        %v471 = vld [vmem:[%s438 + $0xf8] sm:$0xff]
        %v504 = vrot.slane %v440, 2
        %v505 = vrot.slane %v440, 4
        %v506 = vrot.slane %v440, 6
        %v507 = vrot.slane %v441, 2
        %v508 = vrot.slane %v441, 4
        %v509 = vrot.slane %v441, 6
        %v510 = vrot.slane %v442, 2
        %v511 = vrot.slane %v442, 4
        %v512 = vrot.slane %v442, 6
        %v513 = vrot.slane %v443, 2
        %v514 = vrot.slane %v443, 4
        %v515 = vrot.slane %v443, 6
        %v516 = vrot.slane %v444, 2
        %v517 = vrot.slane %v444, 4
        %v518 = vrot.slane %v444, 6
        %v519 = vrot.slane %v445, 2
        %v520 = vrot.slane %v445, 4
        %v521 = vrot.slane %v445, 6
        %v522 = vrot.slane %v446, 2
        %v523 = vrot.slane %v446, 4
        %v524 = vrot.slane %v446, 6
        %v525 = vrot.slane %v447, 2
        %v526 = vrot.slane %v447, 4
        %v527 = vrot.slane %v447, 6
        %v528 = vrot.slane %v448, 2
        %v529 = vrot.slane %v448, 4
        %v530 = vrot.slane %v448, 6
        %v531 = vrot.slane %v449, 2
        %v532 = vrot.slane %v449, 4
        %v533 = vrot.slane %v449, 6
        %v534 = vrot.slane %v450, 2
        %v535 = vrot.slane %v450, 4
        %v536 = vrot.slane %v450, 6
        %v537 = vrot.slane %v451, 2
        %v538 = vrot.slane %v451, 4
        %v539 = vrot.slane %v451, 6
        %v540 = vrot.slane %v452, 2
        %v541 = vrot.slane %v452, 4
        %v542 = vrot.slane %v452, 6
        %v543 = vrot.slane %v453, 2
        %v544 = vrot.slane %v453, 4
        %v545 = vrot.slane %v453, 6
        %v546 = vrot.slane %v454, 2
        %v547 = vrot.slane %v454, 4
        %v548 = vrot.slane %v454, 6
        %v549 = vrot.slane %v455, 2
        %v550 = vrot.slane %v455, 4
        %v551 = vrot.slane %v455, 6
        %v552 = vrot.slane %v456, 2
        %v553 = vrot.slane %v456, 4
        %v554 = vrot.slane %v456, 6
        %v555 = vrot.slane %v457, 2
        %v556 = vrot.slane %v457, 4
        %v557 = vrot.slane %v457, 6
        %v558 = vrot.slane %v458, 2
        %v559 = vrot.slane %v458, 4
        %v560 = vrot.slane %v458, 6
        %v561 = vrot.slane %v459, 2
        %v562 = vrot.slane %v459, 4
        %v563 = vrot.slane %v459, 6
        %v564 = vrot.slane %v460, 2
        %v565 = vrot.slane %v460, 4
        %v566 = vrot.slane %v460, 6
        %v567 = vrot.slane %v461, 2
        %v568 = vrot.slane %v461, 4
        %v569 = vrot.slane %v461, 6
        %v570 = vrot.slane %v462, 2
        %v571 = vrot.slane %v462, 4
        %v572 = vrot.slane %v462, 6
        %v573 = vrot.slane %v463, 2
        %v574 = vrot.slane %v463, 4
        %v575 = vrot.slane %v463, 6
        %v576 = vrot.slane %v464, 2
        %v577 = vrot.slane %v464, 4
        %v578 = vrot.slane %v464, 6
        %v579 = vrot.slane %v465, 2
        %v580 = vrot.slane %v465, 4
        %v581 = vrot.slane %v465, 6
        %v582 = vrot.slane %v466, 2
        %v583 = vrot.slane %v466, 4
        %v584 = vrot.slane %v466, 6
        %v585 = vrot.slane %v467, 2
        %v586 = vrot.slane %v467, 4
        %v587 = vrot.slane %v467, 6
        %v588 = vrot.slane %v468, 2
        %v589 = vrot.slane %v468, 4
        %v590 = vrot.slane %v468, 6
        %v591 = vrot.slane %v469, 2
        %v592 = vrot.slane %v469, 4
        %v593 = vrot.slane %v469, 6
        %v594 = vrot.slane %v470, 2
        %v595 = vrot.slane %v470, 4
        %v596 = vrot.slane %v470, 6
        %v597 = vrot.slane %v471, 2
        %v598 = vrot.slane %v471, 4
        %v599 = vrot.slane %v471, 6
        %vm696 = vcmask 25600
        %v697 = vsel %vm696, %v440, 0.0
        %v698 = vsel %vm696, %v442, 0.0
        %v699 = vadd.f32 %v697, %v698
        %v700 = vrot.slane %v699, 4
        %v701 = vadd.f32 %v699, %v700
        %v702 = vrot.slane %v701, 2
        %v703 = vadd.f32 %v701, %v702
        %v704 = vrot.slane %v703, 1
        %v705 = vadd.f32 %v703, %v704
        %v706 = vsel %vm696, %v504, 0.0
        %v707 = vsel %vm696, %v510, 0.0
        %v708 = vadd.f32 %v706, %v707
        %v709 = vrot.slane %v708, 4
        %v710 = vadd.f32 %v708, %v709
        %v711 = vrot.slane %v710, 2
        %v712 = vadd.f32 %v710, %v711
        %v713 = vrot.slane %v712, 1
        %v714 = vadd.f32 %v712, %v713
        %v715 = vsel %vm696, %v505, 0.0
        %v716 = vsel %vm696, %v511, 0.0
        %v717 = vadd.f32 %v715, %v716
        %v718 = vrot.slane %v717, 4
        %v719 = vadd.f32 %v717, %v718
        %v720 = vrot.slane %v719, 2
        %v721 = vadd.f32 %v719, %v720
        %v722 = vrot.slane %v721, 1
        %v723 = vadd.f32 %v721, %v722
        %v724 = vsel %vm696, %v506, 0.0
        %v725 = vsel %vm696, %v512, 0.0
        %v726 = vadd.f32 %v724, %v725
        %v727 = vrot.slane %v726, 4
        %v728 = vadd.f32 %v726, %v727
        %v729 = vrot.slane %v728, 2
        %v730 = vadd.f32 %v728, %v729
        %v731 = vrot.slane %v730, 1
        %v732 = vadd.f32 %v730, %v731
        %v733 = vsel %vm696, %v441, 0.0
        %v734 = vsel %vm696, %v443, 0.0
        %v735 = vadd.f32 %v733, %v734
        %v736 = vrot.slane %v735, 4
        %v737 = vadd.f32 %v735, %v736
        %v738 = vrot.slane %v737, 2
        %v739 = vadd.f32 %v737, %v738
        %v740 = vrot.slane %v739, 1
        %v741 = vadd.f32 %v739, %v740
        %v742 = vsel %vm696, %v507, 0.0
        %v743 = vsel %vm696, %v513, 0.0
        %v744 = vadd.f32 %v742, %v743
        %v745 = vrot.slane %v744, 4
        %v746 = vadd.f32 %v744, %v745
        %v747 = vrot.slane %v746, 2
        %v748 = vadd.f32 %v746, %v747
        %v749 = vrot.slane %v748, 1
        %v750 = vadd.f32 %v748, %v749
        %v751 = vsel %vm696, %v508, 0.0
        %v752 = vsel %vm696, %v514, 0.0
        %v753 = vadd.f32 %v751, %v752
        %v754 = vrot.slane %v753, 4
        %v755 = vadd.f32 %v753, %v754
        %v756 = vrot.slane %v755, 2
        %v757 = vadd.f32 %v755, %v756
        %v758 = vrot.slane %v757, 1
        %v759 = vadd.f32 %v757, %v758
        %v760 = vsel %vm696, %v509, 0.0
        %v761 = vsel %vm696, %v515, 0.0
        %v762 = vadd.f32 %v760, %v761
        %v763 = vrot.slane %v762, 4
        %v764 = vadd.f32 %v762, %v763
        %v765 = vrot.slane %v764, 2
        %v766 = vadd.f32 %v764, %v765
        %v767 = vrot.slane %v766, 1
        %v768 = vadd.f32 %v766, %v767
        %v769 = vsel %vm696, %v444, 0.0
        %v770 = vsel %vm696, %v446, 0.0
        %v771 = vadd.f32 %v769, %v770
        %v772 = vrot.slane %v771, 4
        %v773 = vadd.f32 %v771, %v772
        %v774 = vrot.slane %v773, 2
        %v775 = vadd.f32 %v773, %v774
        %v776 = vrot.slane %v775, 1
        %v777 = vadd.f32 %v775, %v776
        %v778 = vsel %vm696, %v516, 0.0
        %v779 = vsel %vm696, %v522, 0.0
        %v780 = vadd.f32 %v778, %v779
        %v781 = vrot.slane %v780, 4
        %v782 = vadd.f32 %v780, %v781
        %v783 = vrot.slane %v782, 2
        %v784 = vadd.f32 %v782, %v783
        %v785 = vrot.slane %v784, 1
        %v786 = vadd.f32 %v784, %v785
        %v787 = vsel %vm696, %v517, 0.0
        %v788 = vsel %vm696, %v523, 0.0
        %v789 = vadd.f32 %v787, %v788
        %v790 = vrot.slane %v789, 4
        %v791 = vadd.f32 %v789, %v790
        %v792 = vrot.slane %v791, 2
        %v793 = vadd.f32 %v791, %v792
        %v794 = vrot.slane %v793, 1
        %v795 = vadd.f32 %v793, %v794
        %v796 = vsel %vm696, %v518, 0.0
        %v797 = vsel %vm696, %v524, 0.0
        %v798 = vadd.f32 %v796, %v797
        %v799 = vrot.slane %v798, 4
        %v800 = vadd.f32 %v798, %v799
        %v801 = vrot.slane %v800, 2
        %v802 = vadd.f32 %v800, %v801
        %v803 = vrot.slane %v802, 1
        %v804 = vadd.f32 %v802, %v803
        %v805 = vsel %vm696, %v445, 0.0
        %v806 = vsel %vm696, %v447, 0.0
        %v807 = vadd.f32 %v805, %v806
        %v808 = vrot.slane %v807, 4
        %v809 = vadd.f32 %v807, %v808
        %v810 = vrot.slane %v809, 2
        %v811 = vadd.f32 %v809, %v810
        %v812 = vrot.slane %v811, 1
        %v813 = vadd.f32 %v811, %v812
        %v814 = vsel %vm696, %v519, 0.0
        %v815 = vsel %vm696, %v525, 0.0
        %v816 = vadd.f32 %v814, %v815
        %v817 = vrot.slane %v816, 4
        %v818 = vadd.f32 %v816, %v817
        %v819 = vrot.slane %v818, 2
        %v820 = vadd.f32 %v818, %v819
        %v821 = vrot.slane %v820, 1
        %v822 = vadd.f32 %v820, %v821
        %v823 = vsel %vm696, %v520, 0.0
        %v824 = vsel %vm696, %v526, 0.0
        %v825 = vadd.f32 %v823, %v824
        %v826 = vrot.slane %v825, 4
        %v827 = vadd.f32 %v825, %v826
        %v828 = vrot.slane %v827, 2
        %v829 = vadd.f32 %v827, %v828
        %v830 = vrot.slane %v829, 1
        %v831 = vadd.f32 %v829, %v830
        %v832 = vsel %vm696, %v521, 0.0
        %v833 = vsel %vm696, %v527, 0.0
        %v834 = vadd.f32 %v832, %v833
        %v835 = vrot.slane %v834, 4
        %v836 = vadd.f32 %v834, %v835
        %v837 = vrot.slane %v836, 2
        %v838 = vadd.f32 %v836, %v837
        %v839 = vrot.slane %v838, 1
        %v840 = vadd.f32 %v838, %v839
        %v841 = vsel %vm696, %v448, 0.0
        %v842 = vsel %vm696, %v450, 0.0
        %v843 = vadd.f32 %v841, %v842
        %v844 = vrot.slane %v843, 4
        %v845 = vadd.f32 %v843, %v844
        %v846 = vrot.slane %v845, 2
        %v847 = vadd.f32 %v845, %v846
        %v848 = vrot.slane %v847, 1
        %v849 = vadd.f32 %v847, %v848
        %v850 = vsel %vm696, %v528, 0.0
        %v851 = vsel %vm696, %v534, 0.0
        %v852 = vadd.f32 %v850, %v851
        %v853 = vrot.slane %v852, 4
        %v854 = vadd.f32 %v852, %v853
        %v855 = vrot.slane %v854, 2
        %v856 = vadd.f32 %v854, %v855
        %v857 = vrot.slane %v856, 1
        %v858 = vadd.f32 %v856, %v857
        %v859 = vsel %vm696, %v529, 0.0
        %v860 = vsel %vm696, %v535, 0.0
        %v861 = vadd.f32 %v859, %v860
        %v862 = vrot.slane %v861, 4
        %v863 = vadd.f32 %v861, %v862
        %v864 = vrot.slane %v863, 2
        %v865 = vadd.f32 %v863, %v864
        %v866 = vrot.slane %v865, 1
        %v867 = vadd.f32 %v865, %v866
        %v868 = vsel %vm696, %v530, 0.0
        %v869 = vsel %vm696, %v536, 0.0
        %v870 = vadd.f32 %v868, %v869
        %v871 = vrot.slane %v870, 4
        %v872 = vadd.f32 %v870, %v871
        %v873 = vrot.slane %v872, 2
        %v874 = vadd.f32 %v872, %v873
        %v875 = vrot.slane %v874, 1
        %v876 = vadd.f32 %v874, %v875
        %v877 = vsel %vm696, %v449, 0.0
        %v878 = vsel %vm696, %v451, 0.0
        %v879 = vadd.f32 %v877, %v878
        %v880 = vrot.slane %v879, 4
        %v881 = vadd.f32 %v879, %v880
        %v882 = vrot.slane %v881, 2
        %v883 = vadd.f32 %v881, %v882
        %v884 = vrot.slane %v883, 1
        %v885 = vadd.f32 %v883, %v884
        %v886 = vsel %vm696, %v531, 0.0
        %v887 = vsel %vm696, %v537, 0.0
        %v888 = vadd.f32 %v886, %v887
        %v889 = vrot.slane %v888, 4
        %v890 = vadd.f32 %v888, %v889
        %v891 = vrot.slane %v890, 2
        %v892 = vadd.f32 %v890, %v891
        %v893 = vrot.slane %v892, 1
        %v894 = vadd.f32 %v892, %v893
        %v895 = vsel %vm696, %v532, 0.0
        %v896 = vsel %vm696, %v538, 0.0
        %v897 = vadd.f32 %v895, %v896
        %v898 = vrot.slane %v897, 4
        %v899 = vadd.f32 %v897, %v898
        %v900 = vrot.slane %v899, 2
        %v901 = vadd.f32 %v899, %v900
        %v902 = vrot.slane %v901, 1
        %v903 = vadd.f32 %v901, %v902
        %v904 = vsel %vm696, %v533, 0.0
        %v905 = vsel %vm696, %v539, 0.0
        %v906 = vadd.f32 %v904, %v905
        %v907 = vrot.slane %v906, 4
        %v908 = vadd.f32 %v906, %v907
        %v909 = vrot.slane %v908, 2
        %v910 = vadd.f32 %v908, %v909
        %v911 = vrot.slane %v910, 1
        %v912 = vadd.f32 %v910, %v911
        %v913 = vsel %vm696, %v452, 0.0
        %v914 = vsel %vm696, %v454, 0.0
        %v915 = vadd.f32 %v913, %v914
        %v916 = vrot.slane %v915, 4
        %v917 = vadd.f32 %v915, %v916
        %v918 = vrot.slane %v917, 2
        %v919 = vadd.f32 %v917, %v918
        %v920 = vrot.slane %v919, 1
        %v921 = vadd.f32 %v919, %v920
        %v922 = vsel %vm696, %v540, 0.0
        %v923 = vsel %vm696, %v546, 0.0
        %v924 = vadd.f32 %v922, %v923
        %v925 = vrot.slane %v924, 4
        %v926 = vadd.f32 %v924, %v925
        %v927 = vrot.slane %v926, 2
        %v928 = vadd.f32 %v926, %v927
        %v929 = vrot.slane %v928, 1
        %v930 = vadd.f32 %v928, %v929
        %v931 = vsel %vm696, %v541, 0.0
        %v932 = vsel %vm696, %v547, 0.0
        %v933 = vadd.f32 %v931, %v932
        %v934 = vrot.slane %v933, 4
        %v935 = vadd.f32 %v933, %v934
        %v936 = vrot.slane %v935, 2
        %v937 = vadd.f32 %v935, %v936
        %v938 = vrot.slane %v937, 1
        %v939 = vadd.f32 %v937, %v938
        %v940 = vsel %vm696, %v542, 0.0
        %v941 = vsel %vm696, %v548, 0.0
        %v942 = vadd.f32 %v940, %v941
        %v943 = vrot.slane %v942, 4
        %v944 = vadd.f32 %v942, %v943
        %v945 = vrot.slane %v944, 2
        %v946 = vadd.f32 %v944, %v945
        %v947 = vrot.slane %v946, 1
        %v948 = vadd.f32 %v946, %v947
        %v949 = vsel %vm696, %v453, 0.0
        %v950 = vsel %vm696, %v455, 0.0
        %v951 = vadd.f32 %v949, %v950
        %v952 = vrot.slane %v951, 4
        %v953 = vadd.f32 %v951, %v952
        %v954 = vrot.slane %v953, 2
        %v955 = vadd.f32 %v953, %v954
        %v956 = vrot.slane %v955, 1
        %v957 = vadd.f32 %v955, %v956
        %v958 = vsel %vm696, %v543, 0.0
        %v959 = vsel %vm696, %v549, 0.0
        %v960 = vadd.f32 %v958, %v959
        %v961 = vrot.slane %v960, 4
        %v962 = vadd.f32 %v960, %v961
        %v963 = vrot.slane %v962, 2
        %v964 = vadd.f32 %v962, %v963
        %v965 = vrot.slane %v964, 1
        %v966 = vadd.f32 %v964, %v965
        %v967 = vsel %vm696, %v544, 0.0
        %v968 = vsel %vm696, %v550, 0.0
        %v969 = vadd.f32 %v967, %v968
        %v970 = vrot.slane %v969, 4
        %v971 = vadd.f32 %v969, %v970
        %v972 = vrot.slane %v971, 2
        %v973 = vadd.f32 %v971, %v972
        %v974 = vrot.slane %v973, 1
        %v975 = vadd.f32 %v973, %v974
        %v976 = vsel %vm696, %v545, 0.0
        %v977 = vsel %vm696, %v551, 0.0
        %v978 = vadd.f32 %v976, %v977
        %v979 = vrot.slane %v978, 4
        %v980 = vadd.f32 %v978, %v979
        %v981 = vrot.slane %v980, 2
        %v982 = vadd.f32 %v980, %v981
        %v983 = vrot.slane %v982, 1
        %v984 = vadd.f32 %v982, %v983
        %v985 = vsel %vm696, %v456, 0.0
        %v986 = vsel %vm696, %v458, 0.0
        %v987 = vadd.f32 %v985, %v986
        %v988 = vrot.slane %v987, 4
        %v989 = vadd.f32 %v987, %v988
        %v990 = vrot.slane %v989, 2
        %v991 = vadd.f32 %v989, %v990
        %v992 = vrot.slane %v991, 1
        %v993 = vadd.f32 %v991, %v992
        %v994 = vsel %vm696, %v552, 0.0
        %v995 = vsel %vm696, %v558, 0.0
        %v996 = vadd.f32 %v994, %v995
        %v997 = vrot.slane %v996, 4
        %v998 = vadd.f32 %v996, %v997
        %v999 = vrot.slane %v998, 2
        %v1000 = vadd.f32 %v998, %v999
        %v1001 = vrot.slane %v1000, 1
        %v1002 = vadd.f32 %v1000, %v1001
        %v1003 = vsel %vm696, %v553, 0.0
        %v1004 = vsel %vm696, %v559, 0.0
        %v1005 = vadd.f32 %v1003, %v1004
        %v1006 = vrot.slane %v1005, 4
        %v1007 = vadd.f32 %v1005, %v1006
        %v1008 = vrot.slane %v1007, 2
        %v1009 = vadd.f32 %v1007, %v1008
        %v1010 = vrot.slane %v1009, 1
        %v1011 = vadd.f32 %v1009, %v1010
        %v1012 = vsel %vm696, %v554, 0.0
        %v1013 = vsel %vm696, %v560, 0.0
        %v1014 = vadd.f32 %v1012, %v1013
        %v1015 = vrot.slane %v1014, 4
        %v1016 = vadd.f32 %v1014, %v1015
        %v1017 = vrot.slane %v1016, 2
        %v1018 = vadd.f32 %v1016, %v1017
        %v1019 = vrot.slane %v1018, 1
        %v1020 = vadd.f32 %v1018, %v1019
        %v1021 = vsel %vm696, %v457, 0.0
        %v1022 = vsel %vm696, %v459, 0.0
        %v1023 = vadd.f32 %v1021, %v1022
        %v1024 = vrot.slane %v1023, 4
        %v1025 = vadd.f32 %v1023, %v1024
        %v1026 = vrot.slane %v1025, 2
        %v1027 = vadd.f32 %v1025, %v1026
        %v1028 = vrot.slane %v1027, 1
        %v1029 = vadd.f32 %v1027, %v1028
        %v1030 = vsel %vm696, %v555, 0.0
        %v1031 = vsel %vm696, %v561, 0.0
        %v1032 = vadd.f32 %v1030, %v1031
        %v1033 = vrot.slane %v1032, 4
        %v1034 = vadd.f32 %v1032, %v1033
        %v1035 = vrot.slane %v1034, 2
        %v1036 = vadd.f32 %v1034, %v1035
        %v1037 = vrot.slane %v1036, 1
        %v1038 = vadd.f32 %v1036, %v1037
        %v1039 = vsel %vm696, %v556, 0.0
        %v1040 = vsel %vm696, %v562, 0.0
        %v1041 = vadd.f32 %v1039, %v1040
        %v1042 = vrot.slane %v1041, 4
        %v1043 = vadd.f32 %v1041, %v1042
        %v1044 = vrot.slane %v1043, 2
        %v1045 = vadd.f32 %v1043, %v1044
        %v1046 = vrot.slane %v1045, 1
        %v1047 = vadd.f32 %v1045, %v1046
        %v1048 = vsel %vm696, %v557, 0.0
        %v1049 = vsel %vm696, %v563, 0.0
        %v1050 = vadd.f32 %v1048, %v1049
        %v1051 = vrot.slane %v1050, 4
        %v1052 = vadd.f32 %v1050, %v1051
        %v1053 = vrot.slane %v1052, 2
        %v1054 = vadd.f32 %v1052, %v1053
        %v1055 = vrot.slane %v1054, 1
        %v1056 = vadd.f32 %v1054, %v1055
        %v1057 = vsel %vm696, %v460, 0.0
        %v1058 = vsel %vm696, %v462, 0.0
        %v1059 = vadd.f32 %v1057, %v1058
        %v1060 = vrot.slane %v1059, 4
        %v1061 = vadd.f32 %v1059, %v1060
        %v1062 = vrot.slane %v1061, 2
        %v1063 = vadd.f32 %v1061, %v1062
        %v1064 = vrot.slane %v1063, 1
        %v1065 = vadd.f32 %v1063, %v1064
        %v1066 = vsel %vm696, %v564, 0.0
        %v1067 = vsel %vm696, %v570, 0.0
        %v1068 = vadd.f32 %v1066, %v1067
        %v1069 = vrot.slane %v1068, 4
        %v1070 = vadd.f32 %v1068, %v1069
        %v1071 = vrot.slane %v1070, 2
        %v1072 = vadd.f32 %v1070, %v1071
        %v1073 = vrot.slane %v1072, 1
        %v1074 = vadd.f32 %v1072, %v1073
        %v1075 = vsel %vm696, %v565, 0.0
        %v1076 = vsel %vm696, %v571, 0.0
        %v1077 = vadd.f32 %v1075, %v1076
        %v1078 = vrot.slane %v1077, 4
        %v1079 = vadd.f32 %v1077, %v1078
        %v1080 = vrot.slane %v1079, 2
        %v1081 = vadd.f32 %v1079, %v1080
        %v1082 = vrot.slane %v1081, 1
        %v1083 = vadd.f32 %v1081, %v1082
        %v1084 = vsel %vm696, %v566, 0.0
        %v1085 = vsel %vm696, %v572, 0.0
        %v1086 = vadd.f32 %v1084, %v1085
        %v1087 = vrot.slane %v1086, 4
        %v1088 = vadd.f32 %v1086, %v1087
        %v1089 = vrot.slane %v1088, 2
        %v1090 = vadd.f32 %v1088, %v1089
        %v1091 = vrot.slane %v1090, 1
        %v1092 = vadd.f32 %v1090, %v1091
        %v1093 = vsel %vm696, %v461, 0.0
        %v1094 = vsel %vm696, %v463, 0.0
        %v1095 = vadd.f32 %v1093, %v1094
        %v1096 = vrot.slane %v1095, 4
        %v1097 = vadd.f32 %v1095, %v1096
        %v1098 = vrot.slane %v1097, 2
        %v1099 = vadd.f32 %v1097, %v1098
        %v1100 = vrot.slane %v1099, 1
        %v1101 = vadd.f32 %v1099, %v1100
        %v1102 = vsel %vm696, %v567, 0.0
        %v1103 = vsel %vm696, %v573, 0.0
        %v1104 = vadd.f32 %v1102, %v1103
        %v1105 = vrot.slane %v1104, 4
        %v1106 = vadd.f32 %v1104, %v1105
        %v1107 = vrot.slane %v1106, 2
        %v1108 = vadd.f32 %v1106, %v1107
        %v1109 = vrot.slane %v1108, 1
        %v1110 = vadd.f32 %v1108, %v1109
        %v1111 = vsel %vm696, %v568, 0.0
        %v1112 = vsel %vm696, %v574, 0.0
        %v1113 = vadd.f32 %v1111, %v1112
        %v1114 = vrot.slane %v1113, 4
        %v1115 = vadd.f32 %v1113, %v1114
        %v1116 = vrot.slane %v1115, 2
        %v1117 = vadd.f32 %v1115, %v1116
        %v1118 = vrot.slane %v1117, 1
        %v1119 = vadd.f32 %v1117, %v1118
        %v1120 = vsel %vm696, %v569, 0.0
        %v1121 = vsel %vm696, %v575, 0.0
        %v1122 = vadd.f32 %v1120, %v1121
        %v1123 = vrot.slane %v1122, 4
        %v1124 = vadd.f32 %v1122, %v1123
        %v1125 = vrot.slane %v1124, 2
        %v1126 = vadd.f32 %v1124, %v1125
        %v1127 = vrot.slane %v1126, 1
        %v1128 = vadd.f32 %v1126, %v1127
        %v1129 = vsel %vm696, %v464, 0.0
        %v1130 = vsel %vm696, %v466, 0.0
        %v1131 = vadd.f32 %v1129, %v1130
        %v1132 = vrot.slane %v1131, 4
        %v1133 = vadd.f32 %v1131, %v1132
        %v1134 = vrot.slane %v1133, 2
        %v1135 = vadd.f32 %v1133, %v1134
        %v1136 = vrot.slane %v1135, 1
        %v1137 = vadd.f32 %v1135, %v1136
        %v1138 = vsel %vm696, %v576, 0.0
        %v1139 = vsel %vm696, %v582, 0.0
        %v1140 = vadd.f32 %v1138, %v1139
        %v1141 = vrot.slane %v1140, 4
        %v1142 = vadd.f32 %v1140, %v1141
        %v1143 = vrot.slane %v1142, 2
        %v1144 = vadd.f32 %v1142, %v1143
        %v1145 = vrot.slane %v1144, 1
        %v1146 = vadd.f32 %v1144, %v1145
        %v1147 = vsel %vm696, %v577, 0.0
        %v1148 = vsel %vm696, %v583, 0.0
        %v1149 = vadd.f32 %v1147, %v1148
        %v1150 = vrot.slane %v1149, 4
        %v1151 = vadd.f32 %v1149, %v1150
        %v1152 = vrot.slane %v1151, 2
        %v1153 = vadd.f32 %v1151, %v1152
        %v1154 = vrot.slane %v1153, 1
        %v1155 = vadd.f32 %v1153, %v1154
        %v1156 = vsel %vm696, %v578, 0.0
        %v1157 = vsel %vm696, %v584, 0.0
        %v1158 = vadd.f32 %v1156, %v1157
        %v1159 = vrot.slane %v1158, 4
        %v1160 = vadd.f32 %v1158, %v1159
        %v1161 = vrot.slane %v1160, 2
        %v1162 = vadd.f32 %v1160, %v1161
        %v1163 = vrot.slane %v1162, 1
        %v1164 = vadd.f32 %v1162, %v1163
        %v1165 = vsel %vm696, %v465, 0.0
        %v1166 = vsel %vm696, %v467, 0.0
        %v1167 = vadd.f32 %v1165, %v1166
        %v1168 = vrot.slane %v1167, 4
        %v1169 = vadd.f32 %v1167, %v1168
        %v1170 = vrot.slane %v1169, 2
        %v1171 = vadd.f32 %v1169, %v1170
        %v1172 = vrot.slane %v1171, 1
        %v1173 = vadd.f32 %v1171, %v1172
        %v1174 = vsel %vm696, %v579, 0.0
        %v1175 = vsel %vm696, %v585, 0.0
        %v1176 = vadd.f32 %v1174, %v1175
        %v1177 = vrot.slane %v1176, 4
        %v1178 = vadd.f32 %v1176, %v1177
        %v1179 = vrot.slane %v1178, 2
        %v1180 = vadd.f32 %v1178, %v1179
        %v1181 = vrot.slane %v1180, 1
        %v1182 = vadd.f32 %v1180, %v1181
        %v1183 = vsel %vm696, %v580, 0.0
        %v1184 = vsel %vm696, %v586, 0.0
        %v1185 = vadd.f32 %v1183, %v1184
        %v1186 = vrot.slane %v1185, 4
        %v1187 = vadd.f32 %v1185, %v1186
        %v1188 = vrot.slane %v1187, 2
        %v1189 = vadd.f32 %v1187, %v1188
        %v1190 = vrot.slane %v1189, 1
        %v1191 = vadd.f32 %v1189, %v1190
        %v1192 = vsel %vm696, %v581, 0.0
        %v1193 = vsel %vm696, %v587, 0.0
        %v1194 = vadd.f32 %v1192, %v1193
        %v1195 = vrot.slane %v1194, 4
        %v1196 = vadd.f32 %v1194, %v1195
        %v1197 = vrot.slane %v1196, 2
        %v1198 = vadd.f32 %v1196, %v1197
        %v1199 = vrot.slane %v1198, 1
        %v1200 = vadd.f32 %v1198, %v1199
        %v1201 = vsel %vm696, %v468, 0.0
        %v1202 = vsel %vm696, %v470, 0.0
        %v1203 = vadd.f32 %v1201, %v1202
        %v1204 = vrot.slane %v1203, 4
        %v1205 = vadd.f32 %v1203, %v1204
        %v1206 = vrot.slane %v1205, 2
        %v1207 = vadd.f32 %v1205, %v1206
        %v1208 = vrot.slane %v1207, 1
        %v1209 = vadd.f32 %v1207, %v1208
        %v1210 = vsel %vm696, %v588, 0.0
        %v1211 = vsel %vm696, %v594, 0.0
        %v1212 = vadd.f32 %v1210, %v1211
        %v1213 = vrot.slane %v1212, 4
        %v1214 = vadd.f32 %v1212, %v1213
        %v1215 = vrot.slane %v1214, 2
        %v1216 = vadd.f32 %v1214, %v1215
        %v1217 = vrot.slane %v1216, 1
        %v1218 = vadd.f32 %v1216, %v1217
        %v1219 = vsel %vm696, %v589, 0.0
        %v1220 = vsel %vm696, %v595, 0.0
        %v1221 = vadd.f32 %v1219, %v1220
        %v1222 = vrot.slane %v1221, 4
        %v1223 = vadd.f32 %v1221, %v1222
        %v1224 = vrot.slane %v1223, 2
        %v1225 = vadd.f32 %v1223, %v1224
        %v1226 = vrot.slane %v1225, 1
        %v1227 = vadd.f32 %v1225, %v1226
        %v1228 = vsel %vm696, %v590, 0.0
        %v1229 = vsel %vm696, %v596, 0.0
        %v1230 = vadd.f32 %v1228, %v1229
        %v1231 = vrot.slane %v1230, 4
        %v1232 = vadd.f32 %v1230, %v1231
        %v1233 = vrot.slane %v1232, 2
        %v1234 = vadd.f32 %v1232, %v1233
        %v1235 = vrot.slane %v1234, 1
        %v1236 = vadd.f32 %v1234, %v1235
        %v1237 = vsel %vm696, %v469, 0.0
        %v1238 = vsel %vm696, %v471, 0.0
        %v1239 = vadd.f32 %v1237, %v1238
        %v1240 = vrot.slane %v1239, 4
        %v1241 = vadd.f32 %v1239, %v1240
        %v1242 = vrot.slane %v1241, 2
        %v1243 = vadd.f32 %v1241, %v1242
        %v1244 = vrot.slane %v1243, 1
        %v1245 = vadd.f32 %v1243, %v1244
        %v1246 = vsel %vm696, %v591, 0.0
        %v1247 = vsel %vm696, %v597, 0.0
        %v1248 = vadd.f32 %v1246, %v1247
        %v1249 = vrot.slane %v1248, 4
        %v1250 = vadd.f32 %v1248, %v1249
        %v1251 = vrot.slane %v1250, 2
        %v1252 = vadd.f32 %v1250, %v1251
        %v1253 = vrot.slane %v1252, 1
        %v1254 = vadd.f32 %v1252, %v1253
        %v1255 = vsel %vm696, %v592, 0.0
        %v1256 = vsel %vm696, %v598, 0.0
        %v1257 = vadd.f32 %v1255, %v1256
        %v1258 = vrot.slane %v1257, 4
        %v1259 = vadd.f32 %v1257, %v1258
        %v1260 = vrot.slane %v1259, 2
        %v1261 = vadd.f32 %v1259, %v1260
        %v1262 = vrot.slane %v1261, 1
        %v1263 = vadd.f32 %v1261, %v1262
        %v1264 = vsel %vm696, %v593, 0.0
        %v1265 = vsel %vm696, %v599, 0.0
        %v1266 = vadd.f32 %v1264, %v1265
        %v1267 = vrot.slane %v1266, 4
        %v1268 = vadd.f32 %v1266, %v1267
        %v1269 = vrot.slane %v1268, 2
        %v1270 = vadd.f32 %v1268, %v1269
        %v1271 = vrot.slane %v1270, 1
        %v1272 = vadd.f32 %v1270, %v1271
        %v1273 = vmul.f32 %v705, 0.25
        %v1274 = vmul.f32 %v714, 0.25
        %v1275 = vmul.f32 %v723, 0.25
        %v1276 = vmul.f32 %v732, 0.25
        %v1277 = vmul.f32 %v741, 0.25
        %v1278 = vmul.f32 %v750, 0.25
        %v1279 = vmul.f32 %v759, 0.25
        %v1280 = vmul.f32 %v768, 0.25
        %v1281 = vmul.f32 %v777, 0.25
        %v1282 = vmul.f32 %v786, 0.25
        %v1283 = vmul.f32 %v795, 0.25
        %v1284 = vmul.f32 %v804, 0.25
        %v1285 = vmul.f32 %v813, 0.25
        %v1286 = vmul.f32 %v822, 0.25
        %v1287 = vmul.f32 %v831, 0.25
        %v1288 = vmul.f32 %v840, 0.25
        %v1289 = vmul.f32 %v849, 0.25
        %v1290 = vmul.f32 %v858, 0.25
        %v1291 = vmul.f32 %v867, 0.25
        %v1292 = vmul.f32 %v876, 0.25
        %v1293 = vmul.f32 %v885, 0.25
        %v1294 = vmul.f32 %v894, 0.25
        %v1295 = vmul.f32 %v903, 0.25
        %v1296 = vmul.f32 %v912, 0.25
        %v1297 = vmul.f32 %v921, 0.25
        %v1298 = vmul.f32 %v930, 0.25
        %v1299 = vmul.f32 %v939, 0.25
        %v1300 = vmul.f32 %v948, 0.25
        %v1301 = vmul.f32 %v957, 0.25
        %v1302 = vmul.f32 %v966, 0.25
        %v1303 = vmul.f32 %v975, 0.25
        %v1304 = vmul.f32 %v984, 0.25
        %v1305 = vmul.f32 %v993, 0.25
        %v1306 = vmul.f32 %v1002, 0.25
        %v1307 = vmul.f32 %v1011, 0.25
        %v1308 = vmul.f32 %v1020, 0.25
        %v1309 = vmul.f32 %v1029, 0.25
        %v1310 = vmul.f32 %v1038, 0.25
        %v1311 = vmul.f32 %v1047, 0.25
        %v1312 = vmul.f32 %v1056, 0.25
        %v1313 = vmul.f32 %v1065, 0.25
        %v1314 = vmul.f32 %v1074, 0.25
        %v1315 = vmul.f32 %v1083, 0.25
        %v1316 = vmul.f32 %v1092, 0.25
        %v1317 = vmul.f32 %v1101, 0.25
        %v1318 = vmul.f32 %v1110, 0.25
        %v1319 = vmul.f32 %v1119, 0.25
        %v1320 = vmul.f32 %v1128, 0.25
        %v1321 = vmul.f32 %v1137, 0.25
        %v1322 = vmul.f32 %v1146, 0.25
        %v1323 = vmul.f32 %v1155, 0.25
        %v1324 = vmul.f32 %v1164, 0.25
        %v1325 = vmul.f32 %v1173, 0.25
        %v1326 = vmul.f32 %v1182, 0.25
        %v1327 = vmul.f32 %v1191, 0.25
        %v1328 = vmul.f32 %v1200, 0.25
        %v1329 = vmul.f32 %v1209, 0.25
        %v1330 = vmul.f32 %v1218, 0.25
        %v1331 = vmul.f32 %v1227, 0.25
        %v1332 = vmul.f32 %v1236, 0.25
        %v1333 = vmul.f32 %v1245, 0.25
        %v1334 = vmul.f32 %v1254, 0.25
        %v1335 = vmul.f32 %v1263, 0.25
        %v1336 = vmul.f32 %v1272, 0.25
        %vm1337 = vcmask 31744
        %1338 = vst.msk [vmem:[#allocation2] sm:$0xff] %vm1337, 0.0
        %1339 = vst.msk [vmem:[#allocation2 + $0x8] sm:$0x3] %vm696, 0.0
        %1340 = vst.msk [vmem:[#allocation2 + $0x10] sm:$0xff] %vm1337, 0.0
        %1341 = vst.msk [vmem:[#allocation2 + $0x18] sm:$0x3] %vm696, 0.0
        %1342 = vst.msk [vmem:[#allocation2 + $0x20] sm:$0xff] %vm1337, 0.0
        %1343 = vst.msk [vmem:[#allocation2 + $0x28] sm:$0x3] %vm696, 0.0
        %1344 = vst.msk [vmem:[#allocation2 + $0x30] sm:$0xff] %vm1337, 0.0
        %1345 = vst.msk [vmem:[#allocation2 + $0x38] sm:$0x3] %vm696, 0.0
        %1346 = vst.msk [vmem:[#allocation2 + $0x40] sm:$0xff] %vm1337, 0.0
        %1347 = vst.msk [vmem:[#allocation2 + $0x48] sm:$0x3] %vm696, 0.0
        %1348 = vst.msk [vmem:[#allocation2 + $0x50] sm:$0xff] %vm1337, 0.0
        %1349 = vst.msk [vmem:[#allocation2 + $0x58] sm:$0x3] %vm696, 0.0
        %1350 = vst.msk [vmem:[#allocation2 + $0x60] sm:$0xff] %vm1337, 0.0
        %1351 = vst.msk [vmem:[#allocation2 + $0x68] sm:$0x3] %vm696, 0.0
        %1352 = vst.msk [vmem:[#allocation2 + $0x70] sm:$0xff] %vm1337, 0.0
        %1353 = vst.msk [vmem:[#allocation2 + $0x78] sm:$0x3] %vm696, 0.0
        %1354 = vst.msk [vmem:[#allocation2 + $0x80] sm:$0xff] %vm1337, 0.0
        %1355 = vst.msk [vmem:[#allocation2 + $0x88] sm:$0x3] %vm696, 0.0
        %1356 = vst.msk [vmem:[#allocation2 + $0x90] sm:$0xff] %vm1337, 0.0
        %1357 = vst.msk [vmem:[#allocation2 + $0x98] sm:$0x3] %vm696, 0.0
        %vm1422 = vcmask 1041409
        %v1423 = vsel %vm1422, %v1274, %v1273
        %vm1424 = vcmask 1042434
        %v1425 = vsel %vm1424, %v1275, %v1423
        %vm1426 = vcmask 1043459
        %v1427 = vsel %vm1426, %v1276, %v1425
        %vm1428 = vcmask 1044484
        %v1429 = vsel %vm1428, %v1277, %v1427
        %vm1430 = vcmask 1045509
        %v1431 = vsel %vm1430, %v1278, %v1429
        %vm1432 = vcmask 1046534
        %v1433 = vsel %vm1432, %v1279, %v1431
        %vm1434 = vcmask 1047559
        %v1435 = vsel %vm1434, %v1280, %v1433
        %v1436 = vsel %vm1422, %v1282, %v1281
        %v1437 = vsel %vm1424, %v1283, %v1436
        %v1438 = vsel %vm1426, %v1284, %v1437
        %v1439 = vsel %vm1428, %v1285, %v1438
        %v1440 = vsel %vm1430, %v1286, %v1439
        %v1441 = vsel %vm1432, %v1287, %v1440
        %v1442 = vsel %vm1434, %v1288, %v1441
        %v1443 = vsel %vm1422, %v1290, %v1289
        %v1444 = vsel %vm1424, %v1291, %v1443
        %v1445 = vsel %vm1426, %v1292, %v1444
        %v1446 = vsel %vm1428, %v1293, %v1445
        %v1447 = vsel %vm1430, %v1294, %v1446
        %v1448 = vsel %vm1432, %v1295, %v1447
        %v1449 = vsel %vm1434, %v1296, %v1448
        %v1450 = vsel %vm1422, %v1298, %v1297
        %v1451 = vsel %vm1424, %v1299, %v1450
        %v1452 = vsel %vm1426, %v1300, %v1451
        %v1453 = vsel %vm1428, %v1301, %v1452
        %v1454 = vsel %vm1430, %v1302, %v1453
        %v1455 = vsel %vm1432, %v1303, %v1454
        %v1456 = vsel %vm1434, %v1304, %v1455
        %v1457 = vsel %vm1422, %v1306, %v1305
        %v1458 = vsel %vm1424, %v1307, %v1457
        %v1459 = vsel %vm1426, %v1308, %v1458
        %v1460 = vsel %vm1428, %v1309, %v1459
        %v1461 = vsel %vm1430, %v1310, %v1460
        %v1462 = vsel %vm1432, %v1311, %v1461
        %v1463 = vsel %vm1434, %v1312, %v1462
        %v1464 = vsel %vm1422, %v1314, %v1313
        %v1465 = vsel %vm1424, %v1315, %v1464
        %v1466 = vsel %vm1426, %v1316, %v1465
        %v1467 = vsel %vm1428, %v1317, %v1466
        %v1468 = vsel %vm1430, %v1318, %v1467
        %v1469 = vsel %vm1432, %v1319, %v1468
        %v1470 = vsel %vm1434, %v1320, %v1469
        %v1471 = vsel %vm1422, %v1322, %v1321
        %v1472 = vsel %vm1424, %v1323, %v1471
        %v1473 = vsel %vm1426, %v1324, %v1472
        %v1474 = vsel %vm1428, %v1325, %v1473
        %v1475 = vsel %vm1430, %v1326, %v1474
        %v1476 = vsel %vm1432, %v1327, %v1475
        %v1477 = vsel %vm1434, %v1328, %v1476
        %v1478 = vsel %vm1422, %v1330, %v1329
        %v1479 = vsel %vm1424, %v1331, %v1478
        %v1480 = vsel %vm1426, %v1332, %v1479
        %v1481 = vsel %vm1428, %v1333, %v1480
        %v1482 = vsel %vm1430, %v1334, %v1481
        %v1483 = vsel %vm1432, %v1335, %v1482
        %v1484 = vsel %vm1434, %v1336, %v1483
        %s1493 = scalar_lea.vmem [#allocation2], 16
        %1494 = vst.msk [vmem:[%s1493 + $0x1] sm:$0xff] %vm1337, %v1435
        %1495 = vst.msk [vmem:[%s1493 + $0x11] sm:$0xff] %vm1337, %v1442
        %1496 = vst.msk [vmem:[%s1493 + $0x21] sm:$0xff] %vm1337, %v1449
        %1497 = vst.msk [vmem:[%s1493 + $0x31] sm:$0xff] %vm1337, %v1456
        %1498 = vst.msk [vmem:[%s1493 + $0x41] sm:$0xff] %vm1337, %v1463
        %1499 = vst.msk [vmem:[%s1493 + $0x51] sm:$0xff] %vm1337, %v1470
        %1500 = vst.msk [vmem:[%s1493 + $0x61] sm:$0xff] %vm1337, %v1477
        %1501 = vst.msk [vmem:[%s1493 + $0x71] sm:$0xff] %vm1337, %v1484
        %v1502 = vld [vmem:[#allocation2] sm:$0xff]
        %v1503 = vld [vmem:[#allocation2 + $0x10] sm:$0xff]
        %v1504 = vld [vmem:[#allocation2 + $0x20] sm:$0xff]
        %v1505 = vld [vmem:[#allocation2 + $0x30] sm:$0xff]
        %v1506 = vld [vmem:[#allocation2 + $0x40] sm:$0xff]
        %v1507 = vld [vmem:[#allocation2 + $0x50] sm:$0xff]
        %v1508 = vld [vmem:[#allocation2 + $0x60] sm:$0xff]
        %v1509 = vld [vmem:[#allocation2 + $0x70] sm:$0xff]
        %1510 = vst.msk [vmem:[#allocation3] sm:$0xff] %vm1337, %v1502
        %1511 = vst.msk [vmem:[#allocation3 + $0x8] sm:$0xff] %vm1337, %v1503
        %1512 = vst.msk [vmem:[#allocation3 + $0x10] sm:$0xff] %vm1337, %v1504
        %1513 = vst.msk [vmem:[#allocation3 + $0x18] sm:$0xff] %vm1337, %v1505
        %1514 = vst.msk [vmem:[#allocation3 + $0x20] sm:$0xff] %vm1337, %v1506
        %1515 = vst.msk [vmem:[#allocation3 + $0x28] sm:$0xff] %vm1337, %v1507
        %1516 = vst.msk [vmem:[#allocation3 + $0x30] sm:$0xff] %vm1337, %v1508
        %1517 = vst.msk [vmem:[#allocation3 + $0x38] sm:$0xff] %vm1337, %v1509
        %v1518 = vld [vmem:[#allocation2 + $0x1] sm:$0xff]
        %v1519 = vld [vmem:[#allocation2 + $0x11] sm:$0xff]
        %v1520 = vld [vmem:[#allocation2 + $0x21] sm:$0xff]
        %v1521 = vld [vmem:[#allocation2 + $0x31] sm:$0xff]
        %v1522 = vld [vmem:[#allocation2 + $0x41] sm:$0xff]
        %v1523 = vld [vmem:[#allocation2 + $0x51] sm:$0xff]
        %v1524 = vld [vmem:[#allocation2 + $0x61] sm:$0xff]
        %v1525 = vld [vmem:[#allocation2 + $0x71] sm:$0xff]
        %1534 = vrot.lane.b32.xlu0 %v1518, 4
        %v1535 = vpop.permute.xlu0 %1534
        %1536 = vrot.lane.b32.xlu0 %v1519, 4
        %v1537 = vpop.permute.xlu0 %1536
        %1538 = vrot.lane.b32.xlu0 %v1520, 4
        %v1539 = vpop.permute.xlu0 %1538
        %1540 = vrot.lane.b32.xlu0 %v1521, 4
        %v1541 = vpop.permute.xlu0 %1540
        %1542 = vrot.lane.b32.xlu0 %v1522, 4
        %v1543 = vpop.permute.xlu0 %1542
        %1544 = vrot.lane.b32.xlu0 %v1523, 4
        %v1545 = vpop.permute.xlu0 %1544
        %1546 = vrot.lane.b32.xlu0 %v1524, 4
        %v1547 = vpop.permute.xlu0 %1546
        %1548 = vrot.lane.b32.xlu0 %v1525, 4
        %v1549 = vpop.permute.xlu0 %1548
        %vm1558 = vcmask 64544
        %1559 = vst.msk [vmem:[#allocation3] sm:$0xff] %vm1558, %v1535
        %1560 = vst.msk [vmem:[#allocation3 + $0x8] sm:$0xff] %vm1558, %v1537
        %1561 = vst.msk [vmem:[#allocation3 + $0x10] sm:$0xff] %vm1558, %v1539
        %1562 = vst.msk [vmem:[#allocation3 + $0x18] sm:$0xff] %vm1558, %v1541
        %1563 = vst.msk [vmem:[#allocation3 + $0x20] sm:$0xff] %vm1558, %v1543
        %1564 = vst.msk [vmem:[#allocation3 + $0x28] sm:$0xff] %vm1558, %v1545
        %1565 = vst.msk [vmem:[#allocation3 + $0x30] sm:$0xff] %vm1558, %v1547
        %1566 = vst.msk [vmem:[#allocation3 + $0x38] sm:$0xff] %vm1558, %v1549
        %v1567 = vld [vmem:[#allocation2 + $0x2] sm:$0xff]
        %v1568 = vld [vmem:[#allocation2 + $0x12] sm:$0xff]
        %v1569 = vld [vmem:[#allocation2 + $0x22] sm:$0xff]
        %v1570 = vld [vmem:[#allocation2 + $0x32] sm:$0xff]
        %v1571 = vld [vmem:[#allocation2 + $0x42] sm:$0xff]
        %v1572 = vld [vmem:[#allocation2 + $0x52] sm:$0xff]
        %v1573 = vld [vmem:[#allocation2 + $0x62] sm:$0xff]
        %v1574 = vld [vmem:[#allocation2 + $0x72] sm:$0xff]
        %1583 = vrot.lane.b32.xlu0 %v1567, 8
        %v1584 = vpop.permute.xlu0 %1583
        %1585 = vrot.lane.b32.xlu0 %v1568, 8
        %v1586 = vpop.permute.xlu0 %1585
        %1587 = vrot.lane.b32.xlu0 %v1569, 8
        %v1588 = vpop.permute.xlu0 %1587
        %1589 = vrot.lane.b32.xlu0 %v1570, 8
        %v1590 = vpop.permute.xlu0 %1589
        %1591 = vrot.lane.b32.xlu0 %v1571, 8
        %v1592 = vpop.permute.xlu0 %1591
        %1593 = vrot.lane.b32.xlu0 %v1572, 8
        %v1594 = vpop.permute.xlu0 %1593
        %1595 = vrot.lane.b32.xlu0 %v1573, 8
        %v1596 = vpop.permute.xlu0 %1595
        %1597 = vrot.lane.b32.xlu0 %v1574, 8
        %v1598 = vpop.permute.xlu0 %1597
        %vm1607 = vcmask 97344
        %1608 = vst.msk [vmem:[#allocation3] sm:$0xff] %vm1607, %v1584
        %1609 = vst.msk [vmem:[#allocation3 + $0x8] sm:$0xff] %vm1607, %v1586
        %1610 = vst.msk [vmem:[#allocation3 + $0x10] sm:$0xff] %vm1607, %v1588
        %1611 = vst.msk [vmem:[#allocation3 + $0x18] sm:$0xff] %vm1607, %v1590
        %1612 = vst.msk [vmem:[#allocation3 + $0x20] sm:$0xff] %vm1607, %v1592
        %1613 = vst.msk [vmem:[#allocation3 + $0x28] sm:$0xff] %vm1607, %v1594
        %1614 = vst.msk [vmem:[#allocation3 + $0x30] sm:$0xff] %vm1607, %v1596
        %1615 = vst.msk [vmem:[#allocation3 + $0x38] sm:$0xff] %vm1607, %v1598
        %v1616 = vld [vmem:[%s1493] sm:$0xff]
        %v1617 = vld [vmem:[%s1493 + $0x10] sm:$0xff]
        %v1618 = vld [vmem:[%s1493 + $0x20] sm:$0xff]
        %v1619 = vld [vmem:[%s1493 + $0x30] sm:$0xff]
        %v1620 = vld [vmem:[%s1493 + $0x40] sm:$0xff]
        %v1621 = vld [vmem:[%s1493 + $0x50] sm:$0xff]
        %v1622 = vld [vmem:[%s1493 + $0x60] sm:$0xff]
        %v1623 = vld [vmem:[%s1493 + $0x70] sm:$0xff]
        %1632 = vrot.lane.b32.xlu0 %v1616, 12
        %v1633 = vpop.permute.xlu0 %1632
        %1634 = vrot.lane.b32.xlu0 %v1617, 12
        %v1635 = vpop.permute.xlu0 %1634
        %1636 = vrot.lane.b32.xlu0 %v1618, 12
        %v1637 = vpop.permute.xlu0 %1636
        %1638 = vrot.lane.b32.xlu0 %v1619, 12
        %v1639 = vpop.permute.xlu0 %1638
        %1640 = vrot.lane.b32.xlu0 %v1620, 12
        %v1641 = vpop.permute.xlu0 %1640
        %1642 = vrot.lane.b32.xlu0 %v1621, 12
        %v1643 = vpop.permute.xlu0 %1642
        %1644 = vrot.lane.b32.xlu0 %v1622, 12
        %v1645 = vpop.permute.xlu0 %1644
        %1646 = vrot.lane.b32.xlu0 %v1623, 12
        %v1647 = vpop.permute.xlu0 %1646
        %vm1656 = vcmask 130144
        %1657 = vst.msk [vmem:[#allocation3] sm:$0xff] %vm1656, %v1633
        %1658 = vst.msk [vmem:[#allocation3 + $0x8] sm:$0xff] %vm1656, %v1635
        %1659 = vst.msk [vmem:[#allocation3 + $0x10] sm:$0xff] %vm1656, %v1637
        %1660 = vst.msk [vmem:[#allocation3 + $0x18] sm:$0xff] %vm1656, %v1639
        %1661 = vst.msk [vmem:[#allocation3 + $0x20] sm:$0xff] %vm1656, %v1641
        %1662 = vst.msk [vmem:[#allocation3 + $0x28] sm:$0xff] %vm1656, %v1643
        %1663 = vst.msk [vmem:[#allocation3 + $0x30] sm:$0xff] %vm1656, %v1645
        %1664 = vst.msk [vmem:[#allocation3 + $0x38] sm:$0xff] %vm1656, %v1647
        %v1665 = vld [vmem:[%s1493 + $0x1] sm:$0xff]
        %v1666 = vld [vmem:[%s1493 + $0x11] sm:$0xff]
        %v1667 = vld [vmem:[%s1493 + $0x21] sm:$0xff]
        %v1668 = vld [vmem:[%s1493 + $0x31] sm:$0xff]
        %v1669 = vld [vmem:[%s1493 + $0x41] sm:$0xff]
        %v1670 = vld [vmem:[%s1493 + $0x51] sm:$0xff]
        %v1671 = vld [vmem:[%s1493 + $0x61] sm:$0xff]
        %v1672 = vld [vmem:[%s1493 + $0x71] sm:$0xff]
        %1681 = vrot.lane.b32.xlu0 %v1665, 16
        %v1682 = vpop.permute.xlu0 %1681
        %1683 = vrot.lane.b32.xlu0 %v1666, 16
        %v1684 = vpop.permute.xlu0 %1683
        %1685 = vrot.lane.b32.xlu0 %v1667, 16
        %v1686 = vpop.permute.xlu0 %1685
        %1687 = vrot.lane.b32.xlu0 %v1668, 16
        %v1688 = vpop.permute.xlu0 %1687
        %1689 = vrot.lane.b32.xlu0 %v1669, 16
        %v1690 = vpop.permute.xlu0 %1689
        %1691 = vrot.lane.b32.xlu0 %v1670, 16
        %v1692 = vpop.permute.xlu0 %1691
        %1693 = vrot.lane.b32.xlu0 %v1671, 16
        %v1694 = vpop.permute.xlu0 %1693
        %1695 = vrot.lane.b32.xlu0 %v1672, 16
        %v1696 = vpop.permute.xlu0 %1695
        %vm1705 = vcmask 162944
        %1706 = vst.msk [vmem:[#allocation3] sm:$0xff] %vm1705, %v1682
        %1707 = vst.msk [vmem:[#allocation3 + $0x8] sm:$0xff] %vm1705, %v1684
        %1708 = vst.msk [vmem:[#allocation3 + $0x10] sm:$0xff] %vm1705, %v1686
        %1709 = vst.msk [vmem:[#allocation3 + $0x18] sm:$0xff] %vm1705, %v1688
        %1710 = vst.msk [vmem:[#allocation3 + $0x20] sm:$0xff] %vm1705, %v1690
        %1711 = vst.msk [vmem:[#allocation3 + $0x28] sm:$0xff] %vm1705, %v1692
        %1712 = vst.msk [vmem:[#allocation3 + $0x30] sm:$0xff] %vm1705, %v1694
        %1713 = vst.msk [vmem:[#allocation3 + $0x38] sm:$0xff] %vm1705, %v1696
        %v1714 = vld [vmem:[%s1493 + $0x2] sm:$0xff]
        %v1715 = vld [vmem:[%s1493 + $0x12] sm:$0xff]
        %v1716 = vld [vmem:[%s1493 + $0x22] sm:$0xff]
        %v1717 = vld [vmem:[%s1493 + $0x32] sm:$0xff]
        %v1718 = vld [vmem:[%s1493 + $0x42] sm:$0xff]
        %v1719 = vld [vmem:[%s1493 + $0x52] sm:$0xff]
        %v1720 = vld [vmem:[%s1493 + $0x62] sm:$0xff]
        %v1721 = vld [vmem:[%s1493 + $0x72] sm:$0xff]
        %1730 = vrot.lane.b32.xlu0 %v1714, 20
        %v1731 = vpop.permute.xlu0 %1730
        %1732 = vrot.lane.b32.xlu0 %v1715, 20
        %v1733 = vpop.permute.xlu0 %1732
        %1734 = vrot.lane.b32.xlu0 %v1716, 20
        %v1735 = vpop.permute.xlu0 %1734
        %1736 = vrot.lane.b32.xlu0 %v1717, 20
        %v1737 = vpop.permute.xlu0 %1736
        %1738 = vrot.lane.b32.xlu0 %v1718, 20
        %v1739 = vpop.permute.xlu0 %1738
        %1740 = vrot.lane.b32.xlu0 %v1719, 20
        %v1741 = vpop.permute.xlu0 %1740
        %1742 = vrot.lane.b32.xlu0 %v1720, 20
        %v1743 = vpop.permute.xlu0 %1742
        %1744 = vrot.lane.b32.xlu0 %v1721, 20
        %v1745 = vpop.permute.xlu0 %1744
        %vm1754 = vcmask 195744
        %1755 = vst.msk [vmem:[#allocation3] sm:$0xff] %vm1754, %v1731
        %1756 = vst.msk [vmem:[#allocation3 + $0x8] sm:$0xff] %vm1754, %v1733
        %1757 = vst.msk [vmem:[#allocation3 + $0x10] sm:$0xff] %vm1754, %v1735
        %1758 = vst.msk [vmem:[#allocation3 + $0x18] sm:$0xff] %vm1754, %v1737
        %1759 = vst.msk [vmem:[#allocation3 + $0x20] sm:$0xff] %vm1754, %v1739
        %1760 = vst.msk [vmem:[#allocation3 + $0x28] sm:$0xff] %vm1754, %v1741
        %1761 = vst.msk [vmem:[#allocation3 + $0x30] sm:$0xff] %vm1754, %v1743
        %1762 = vst.msk [vmem:[#allocation3 + $0x38] sm:$0xff] %vm1754, %v1745
        %s1763 = scalar_lea.vmem [#allocation2], 32
        %v1764 = vld [vmem:[%s1763] sm:$0xff]
        %v1765 = vld [vmem:[%s1763 + $0x10] sm:$0xff]
        %v1766 = vld [vmem:[%s1763 + $0x20] sm:$0xff]
        %v1767 = vld [vmem:[%s1763 + $0x30] sm:$0xff]
        %v1768 = vld [vmem:[%s1763 + $0x40] sm:$0xff]
        %v1769 = vld [vmem:[%s1763 + $0x50] sm:$0xff]
        %v1770 = vld [vmem:[%s1763 + $0x60] sm:$0xff]
        %v1771 = vld [vmem:[%s1763 + $0x70] sm:$0xff]
        %1780 = vrot.lane.b32.xlu0 %v1764, 24
        %v1781 = vpop.permute.xlu0 %1780
        %1782 = vrot.lane.b32.xlu0 %v1765, 24
        %v1783 = vpop.permute.xlu0 %1782
        %1784 = vrot.lane.b32.xlu0 %v1766, 24
        %v1785 = vpop.permute.xlu0 %1784
        %1786 = vrot.lane.b32.xlu0 %v1767, 24
        %v1787 = vpop.permute.xlu0 %1786
        %1788 = vrot.lane.b32.xlu0 %v1768, 24
        %v1789 = vpop.permute.xlu0 %1788
        %1790 = vrot.lane.b32.xlu0 %v1769, 24
        %v1791 = vpop.permute.xlu0 %1790
        %1792 = vrot.lane.b32.xlu0 %v1770, 24
        %v1793 = vpop.permute.xlu0 %1792
        %1794 = vrot.lane.b32.xlu0 %v1771, 24
        %v1795 = vpop.permute.xlu0 %1794
        %vm1804 = vcmask 228544
        %1805 = vst.msk [vmem:[#allocation3] sm:$0xff] %vm1804, %v1781
        %1806 = vst.msk [vmem:[#allocation3 + $0x8] sm:$0xff] %vm1804, %v1783
        %1807 = vst.msk [vmem:[#allocation3 + $0x10] sm:$0xff] %vm1804, %v1785
        %1808 = vst.msk [vmem:[#allocation3 + $0x18] sm:$0xff] %vm1804, %v1787
        %1809 = vst.msk [vmem:[#allocation3 + $0x20] sm:$0xff] %vm1804, %v1789
        %1810 = vst.msk [vmem:[#allocation3 + $0x28] sm:$0xff] %vm1804, %v1791
        %1811 = vst.msk [vmem:[#allocation3 + $0x30] sm:$0xff] %vm1804, %v1793
        %1812 = vst.msk [vmem:[#allocation3 + $0x38] sm:$0xff] %vm1804, %v1795
        %v1813 = vld [vmem:[%s1763 + $0x1] sm:$0xff]
        %v1814 = vld [vmem:[%s1763 + $0x11] sm:$0xff]
        %v1815 = vld [vmem:[%s1763 + $0x21] sm:$0xff]
        %v1816 = vld [vmem:[%s1763 + $0x31] sm:$0xff]
        %v1817 = vld [vmem:[%s1763 + $0x41] sm:$0xff]
        %v1818 = vld [vmem:[%s1763 + $0x51] sm:$0xff]
        %v1819 = vld [vmem:[%s1763 + $0x61] sm:$0xff]
        %v1820 = vld [vmem:[%s1763 + $0x71] sm:$0xff]
        %1829 = vrot.lane.b32.xlu0 %v1813, 28
        %v1830 = vpop.permute.xlu0 %1829
        %1831 = vrot.lane.b32.xlu0 %v1814, 28
        %v1832 = vpop.permute.xlu0 %1831
        %1833 = vrot.lane.b32.xlu0 %v1815, 28
        %v1834 = vpop.permute.xlu0 %1833
        %1835 = vrot.lane.b32.xlu0 %v1816, 28
        %v1836 = vpop.permute.xlu0 %1835
        %1837 = vrot.lane.b32.xlu0 %v1817, 28
        %v1838 = vpop.permute.xlu0 %1837
        %1839 = vrot.lane.b32.xlu0 %v1818, 28
        %v1840 = vpop.permute.xlu0 %1839
        %1841 = vrot.lane.b32.xlu0 %v1819, 28
        %v1842 = vpop.permute.xlu0 %1841
        %1843 = vrot.lane.b32.xlu0 %v1820, 28
        %v1844 = vpop.permute.xlu0 %1843
        %vm1853 = vcmask 261344
        %1854 = vst.msk [vmem:[#allocation3] sm:$0xff] %vm1853, %v1830
        %1855 = vst.msk [vmem:[#allocation3 + $0x8] sm:$0xff] %vm1853, %v1832
        %1856 = vst.msk [vmem:[#allocation3 + $0x10] sm:$0xff] %vm1853, %v1834
        %1857 = vst.msk [vmem:[#allocation3 + $0x18] sm:$0xff] %vm1853, %v1836
        %1858 = vst.msk [vmem:[#allocation3 + $0x20] sm:$0xff] %vm1853, %v1838
        %1859 = vst.msk [vmem:[#allocation3 + $0x28] sm:$0xff] %vm1853, %v1840
        %1860 = vst.msk [vmem:[#allocation3 + $0x30] sm:$0xff] %vm1853, %v1842
        %1861 = vst.msk [vmem:[#allocation3 + $0x38] sm:$0xff] %vm1853, %v1844
        %v1862 = vld [vmem:[%s1763 + $0x2] sm:$0xff]
        %v1863 = vld [vmem:[%s1763 + $0x12] sm:$0xff]
        %v1864 = vld [vmem:[%s1763 + $0x22] sm:$0xff]
        %v1865 = vld [vmem:[%s1763 + $0x32] sm:$0xff]
        %v1866 = vld [vmem:[%s1763 + $0x42] sm:$0xff]
        %v1867 = vld [vmem:[%s1763 + $0x52] sm:$0xff]
        %v1868 = vld [vmem:[%s1763 + $0x62] sm:$0xff]
        %v1869 = vld [vmem:[%s1763 + $0x72] sm:$0xff]
        %1878 = vrot.lane.b32.xlu0 %v1862, 32
        %v1879 = vpop.permute.xlu0 %1878
        %1880 = vrot.lane.b32.xlu0 %v1863, 32
        %v1881 = vpop.permute.xlu0 %1880
        %1882 = vrot.lane.b32.xlu0 %v1864, 32
        %v1883 = vpop.permute.xlu0 %1882
        %1884 = vrot.lane.b32.xlu0 %v1865, 32
        %v1885 = vpop.permute.xlu0 %1884
        %1886 = vrot.lane.b32.xlu0 %v1866, 32
        %v1887 = vpop.permute.xlu0 %1886
        %1888 = vrot.lane.b32.xlu0 %v1867, 32
        %v1889 = vpop.permute.xlu0 %1888
        %1890 = vrot.lane.b32.xlu0 %v1868, 32
        %v1891 = vpop.permute.xlu0 %1890
        %1892 = vrot.lane.b32.xlu0 %v1869, 32
        %v1893 = vpop.permute.xlu0 %1892
        %vm1902 = vcmask 294144
        %1903 = vst.msk [vmem:[#allocation3] sm:$0xff] %vm1902, %v1879
        %1904 = vst.msk [vmem:[#allocation3 + $0x8] sm:$0xff] %vm1902, %v1881
        %1905 = vst.msk [vmem:[#allocation3 + $0x10] sm:$0xff] %vm1902, %v1883
        %1906 = vst.msk [vmem:[#allocation3 + $0x18] sm:$0xff] %vm1902, %v1885
        %1907 = vst.msk [vmem:[#allocation3 + $0x20] sm:$0xff] %vm1902, %v1887
        %1908 = vst.msk [vmem:[#allocation3 + $0x28] sm:$0xff] %vm1902, %v1889
        %1909 = vst.msk [vmem:[#allocation3 + $0x30] sm:$0xff] %vm1902, %v1891
        %1910 = vst.msk [vmem:[#allocation3 + $0x38] sm:$0xff] %vm1902, %v1893
        %v1911 = vld [vmem:[#allocation3] sm:$0xff]
        %v1912 = vld [vmem:[#allocation3 + $0x8] sm:$0xff]
        %v1913 = vld [vmem:[#allocation3 + $0x10] sm:$0xff]
        %v1914 = vld [vmem:[#allocation3 + $0x18] sm:$0xff]
        %v1915 = vld [vmem:[#allocation3 + $0x20] sm:$0xff]
        %v1916 = vld [vmem:[#allocation3 + $0x28] sm:$0xff]
        %v1917 = vld [vmem:[#allocation3 + $0x30] sm:$0xff]
        %v1918 = vld [vmem:[#allocation3 + $0x38] sm:$0xff]
        %v1919 = vpack.c.bf16 %v1912, %v1911
        %v1920 = vpack.c.bf16 %v1914, %v1913
        %v1921 = vpack.c.bf16 %v1916, %v1915
        %v1922 = vpack.c.bf16 %v1918, %v1917
        %v1923 = vld [vmem:[%s1] sm:$0xff]
        %v1924 = vld [vmem:[%s1 + $0x8] sm:$0xff]
        %v1925 = vld [vmem:[%s1 + $0x10] sm:$0xff]
        %v1926 = vld [vmem:[%s1 + $0x18] sm:$0xff]
        %v1927 = vld [vmem:[%s1 + $0x20] sm:$0xf]
        %v1928 = vpack.c.bf16 %v1924, %v1923
        %v1929 = vpack.c.bf16 %v1926, %v1925
        %v1930 = vpack.c.bf16 %v1927, %v1927
        %vm1931 = vcmask 293888
        %v1933 = vsel %vm1931, %v1919, 0
        %v1936 = vsel %vm1931, %v1920, 0
        %v1939 = vsel %vm1931, %v1921, 0
        %v1942 = vsel %vm1931, %v1922, 0
        %vm1944 = vcmask 1041408
        %v1946 = vsel %vm1944, %v1930, 0
        %1948 = vmatpush.bf16.msra.mxu0 0
        %1949 = vmatpush.bf16.msra.mxu0 0
        %1950 = vmatpush.bf16.msra.mxu0 0
        %1951 = vmatpush.bf16.msra.mxu0 0
        %1952 = vmatpush.bf16.msra.mxu0 0
        %1953 = vmatpush.bf16.msra.mxu0 %v1946
        %1954 = vmatpush.bf16.msra.mxu0 %v1929
        %1955 = vmatpush.bf16.msra.mxu0 %v1928
        %1956 = vmatmul.bf16.gmra.mxu0 %v1933
        %v1957 = vpop.f32.mrf.mxu0
        %v1958 = vadd.f32 0.0, %v1957
        %v1959 = vpop.f32.mrf.mxu0
        %v1960 = vadd.f32 0.0, %v1959
        %1961 = vmatmul.bf16.gmra.mxu0 %v1936
        %v1962 = vpop.f32.mrf.mxu0
        %v1963 = vadd.f32 0.0, %v1962
        %v1964 = vpop.f32.mrf.mxu0
        %v1965 = vadd.f32 0.0, %v1964
        %1966 = vmatmul.bf16.gmra.mxu0 %v1939
        %v1967 = vpop.f32.mrf.mxu0
        %v1968 = vadd.f32 0.0, %v1967
        %v1969 = vpop.f32.mrf.mxu0
        %v1970 = vadd.f32 0.0, %v1969
        %1971 = vmatmul.bf16.gmra.mxu0 %v1942
        %v1972 = vpop.f32.mrf.mxu0
        %v1973 = vadd.f32 0.0, %v1972
        %v1974 = vpop.f32.mrf.mxu0
        %v1975 = vadd.f32 0.0, %v1974
        %1976 = vdwg.mxu0
        %v1977 = vld [vmem:[%s2] sm:$0x1]
        %v1979 = vperm.slane %v1977, 0
        %v1981 = vmul.f32 %v1958, %v1979
        %v1982 = vmul.f32 %v1960, %v1979
        %v1983 = vmul.f32 %v1963, %v1979
        %v1984 = vmul.f32 %v1965, %v1979
        %v1985 = vmul.f32 %v1968, %v1979
        %v1986 = vmul.f32 %v1970, %v1979
        %v1987 = vmul.f32 %v1973, %v1979
        %v1988 = vmul.f32 %v1975, %v1979
        %v1989 = vld [vmem:[%s3] sm:$0x1]
        %v1991 = vperm.slane %v1989, 0
        %v1993 = vadd.f32 %v1981, %v1991
        %v1994 = vadd.f32 %v1982, %v1991
        %v1995 = vadd.f32 %v1983, %v1991
        %v1996 = vadd.f32 %v1984, %v1991
        %v1997 = vadd.f32 %v1985, %v1991
        %v1998 = vadd.f32 %v1986, %v1991
        %v1999 = vadd.f32 %v1987, %v1991
        %v2000 = vadd.f32 %v1988, %v1991
        %v2001 = vmax.f32 %v1993, 0.0
        %v2002 = vmax.f32 %v1994, 0.0
        %v2003 = vmax.f32 %v1995, 0.0
        %v2004 = vmax.f32 %v1996, 0.0
        %v2005 = vmax.f32 %v1997, 0.0
        %v2006 = vmax.f32 %v1998, 0.0
        %v2007 = vmax.f32 %v1999, 0.0
        %v2008 = vmax.f32 %v2000, 0.0
        %vm2009 = vcmask 64512
        %2010 = vst.msk [vmem:[#allocation4] sm:$0xff] %vm2009, 0.0
        %vm2011 = vcmask 58368
        %2012 = vst.msk [vmem:[#allocation4 + $0x8] sm:$0x3] %vm2011, 0.0
        %2013 = vst.msk [vmem:[#allocation4 + $0x10] sm:$0xff] %vm2009, 0.0
        %2014 = vst.msk [vmem:[#allocation4 + $0x18] sm:$0x3] %vm2011, 0.0
        %2015 = vst.msk [vmem:[#allocation4 + $0x20] sm:$0xff] %vm2009, 0.0
        %2016 = vst.msk [vmem:[#allocation4 + $0x28] sm:$0x3] %vm2011, 0.0
        %2017 = vst.msk [vmem:[#allocation4 + $0x30] sm:$0xff] %vm2009, 0.0
        %2018 = vst.msk [vmem:[#allocation4 + $0x38] sm:$0x3] %vm2011, 0.0
        %2019 = vst.msk [vmem:[#allocation4 + $0x40] sm:$0xff] %vm2009, 0.0
        %2020 = vst.msk [vmem:[#allocation4 + $0x48] sm:$0x3] %vm2011, 0.0
        %2021 = vst.msk [vmem:[#allocation4 + $0x50] sm:$0xff] %vm2009, 0.0
        %2022 = vst.msk [vmem:[#allocation4 + $0x58] sm:$0x3] %vm2011, 0.0
        %2023 = vst.msk [vmem:[#allocation4 + $0x60] sm:$0xff] %vm2009, 0.0
        %2024 = vst.msk [vmem:[#allocation4 + $0x68] sm:$0x3] %vm2011, 0.0
        %2025 = vst.msk [vmem:[#allocation4 + $0x70] sm:$0xff] %vm2009, 0.0
        %2026 = vst.msk [vmem:[#allocation4 + $0x78] sm:$0x3] %vm2011, 0.0
        %2027 = vst.msk [vmem:[#allocation4 + $0x80] sm:$0xff] %vm2009, 0.0
        %2028 = vst.msk [vmem:[#allocation4 + $0x88] sm:$0x3] %vm2011, 0.0
        %2029 = vst.msk [vmem:[#allocation4 + $0x90] sm:$0xff] %vm2009, 0.0
        %2030 = vst.msk [vmem:[#allocation4 + $0x98] sm:$0x3] %vm2011, 0.0
        %s2031 = scalar_lea.vmem [#allocation4], 16
        %2032 = vst.msk [vmem:[%s2031 + $0x1] sm:$0xff] %vm2009, %v2001
        %2033 = vst.msk [vmem:[%s2031 + $0x11] sm:$0xff] %vm2009, %v2002
        %2034 = vst.msk [vmem:[%s2031 + $0x21] sm:$0xff] %vm2009, %v2003
        %2035 = vst.msk [vmem:[%s2031 + $0x31] sm:$0xff] %vm2009, %v2004
        %2036 = vst.msk [vmem:[%s2031 + $0x41] sm:$0xff] %vm2009, %v2005
        %2037 = vst.msk [vmem:[%s2031 + $0x51] sm:$0xff] %vm2009, %v2006
        %2038 = vst.msk [vmem:[%s2031 + $0x61] sm:$0xff] %vm2009, %v2007
        %2039 = vst.msk [vmem:[%s2031 + $0x71] sm:$0xff] %vm2009, %v2008
        %v2040 = vld [vmem:[%s4] sm:$0x1]
        %v2041 = vld [vmem:[#allocation4] sm:$0xff]
        %v2042 = vld [vmem:[#allocation4 + $0x10] sm:$0xff]
        %v2043 = vld [vmem:[#allocation4 + $0x20] sm:$0xff]
        %v2044 = vld [vmem:[#allocation4 + $0x30] sm:$0xff]
        %v2045 = vld [vmem:[#allocation4 + $0x40] sm:$0xff]
        %v2046 = vld [vmem:[#allocation4 + $0x50] sm:$0xff]
        %v2047 = vld [vmem:[#allocation4 + $0x60] sm:$0xff]
        %v2048 = vld [vmem:[#allocation4 + $0x70] sm:$0xff]
        %v2050 = vperm.slane %v2040, 0
        %v2052 = vmul.f32 %v2041, %v2050
        %v2053 = vmul.f32 %v2042, %v2050
        %v2054 = vmul.f32 %v2043, %v2050
        %v2055 = vmul.f32 %v2044, %v2050
        %v2056 = vmul.f32 %v2045, %v2050
        %v2057 = vmul.f32 %v2046, %v2050
        %v2058 = vmul.f32 %v2047, %v2050
        %v2059 = vmul.f32 %v2048, %v2050
        %v2060 = vadd.f32 %v2052, 0.0
        %v2061 = vadd.f32 %v2053, 0.0
        %v2062 = vadd.f32 %v2054, 0.0
        %v2063 = vadd.f32 %v2055, 0.0
        %v2064 = vadd.f32 %v2056, 0.0
        %v2065 = vadd.f32 %v2057, 0.0
        %v2066 = vadd.f32 %v2058, 0.0
        %v2067 = vadd.f32 %v2059, 0.0
        %s2068 = scalar_lea.vmem %s4, 1
        %v2069 = vld [vmem:[%s2068] sm:$0x1]
        %v2070 = vld [vmem:[#allocation4 + $0x1] sm:$0xff]
        %v2071 = vld [vmem:[#allocation4 + $0x11] sm:$0xff]
        %v2072 = vld [vmem:[#allocation4 + $0x21] sm:$0xff]
        %v2073 = vld [vmem:[#allocation4 + $0x31] sm:$0xff]
        %v2074 = vld [vmem:[#allocation4 + $0x41] sm:$0xff]
        %v2075 = vld [vmem:[#allocation4 + $0x51] sm:$0xff]
        %v2076 = vld [vmem:[#allocation4 + $0x61] sm:$0xff]
        %v2077 = vld [vmem:[#allocation4 + $0x71] sm:$0xff]
        %v2079 = vperm.slane %v2069, 0
        %v2081 = vmul.f32 %v2070, %v2079
        %v2082 = vmul.f32 %v2071, %v2079
        %v2083 = vmul.f32 %v2072, %v2079
        %v2084 = vmul.f32 %v2073, %v2079
        %v2085 = vmul.f32 %v2074, %v2079
        %v2086 = vmul.f32 %v2075, %v2079
        %v2087 = vmul.f32 %v2076, %v2079
        %v2088 = vmul.f32 %v2077, %v2079
        %v2089 = vadd.f32 %v2060, %v2081
        %v2090 = vadd.f32 %v2061, %v2082
        %v2091 = vadd.f32 %v2062, %v2083
        %v2092 = vadd.f32 %v2063, %v2084
        %v2093 = vadd.f32 %v2064, %v2085
        %v2094 = vadd.f32 %v2065, %v2086
        %v2095 = vadd.f32 %v2066, %v2087
        %v2096 = vadd.f32 %v2067, %v2088
        %s2097 = scalar_lea.vmem %s4, 2
        %v2098 = vld [vmem:[%s2097] sm:$0x1]
        %v2099 = vld [vmem:[#allocation4 + $0x2] sm:$0xff]
        %v2100 = vld [vmem:[#allocation4 + $0x12] sm:$0xff]
        %v2101 = vld [vmem:[#allocation4 + $0x22] sm:$0xff]
        %v2102 = vld [vmem:[#allocation4 + $0x32] sm:$0xff]
        %v2103 = vld [vmem:[#allocation4 + $0x42] sm:$0xff]
        %v2104 = vld [vmem:[#allocation4 + $0x52] sm:$0xff]
        %v2105 = vld [vmem:[#allocation4 + $0x62] sm:$0xff]
        %v2106 = vld [vmem:[#allocation4 + $0x72] sm:$0xff]
        %v2108 = vperm.slane %v2098, 0
        %v2110 = vmul.f32 %v2099, %v2108
        %v2111 = vmul.f32 %v2100, %v2108
        %v2112 = vmul.f32 %v2101, %v2108
        %v2113 = vmul.f32 %v2102, %v2108
        %v2114 = vmul.f32 %v2103, %v2108
        %v2115 = vmul.f32 %v2104, %v2108
        %v2116 = vmul.f32 %v2105, %v2108
        %v2117 = vmul.f32 %v2106, %v2108
        %v2118 = vadd.f32 %v2089, %v2110
        %v2119 = vadd.f32 %v2090, %v2111
        %v2120 = vadd.f32 %v2091, %v2112
        %v2121 = vadd.f32 %v2092, %v2113
        %v2122 = vadd.f32 %v2093, %v2114
        %v2123 = vadd.f32 %v2094, %v2115
        %v2124 = vadd.f32 %v2095, %v2116
        %v2125 = vadd.f32 %v2096, %v2117
        %s2126 = scalar_lea.vmem %s4, 3
        %v2127 = vld [vmem:[%s2126] sm:$0x1]
        %v2128 = vld [vmem:[%s2031] sm:$0xff]
        %v2129 = vld [vmem:[%s2031 + $0x10] sm:$0xff]
        %v2130 = vld [vmem:[%s2031 + $0x20] sm:$0xff]
        %v2131 = vld [vmem:[%s2031 + $0x30] sm:$0xff]
        %v2132 = vld [vmem:[%s2031 + $0x40] sm:$0xff]
        %v2133 = vld [vmem:[%s2031 + $0x50] sm:$0xff]
        %v2134 = vld [vmem:[%s2031 + $0x60] sm:$0xff]
        %v2135 = vld [vmem:[%s2031 + $0x70] sm:$0xff]
        %v2137 = vperm.slane %v2127, 0
        %v2139 = vmul.f32 %v2128, %v2137
        %v2140 = vmul.f32 %v2129, %v2137
        %v2141 = vmul.f32 %v2130, %v2137
        %v2142 = vmul.f32 %v2131, %v2137
        %v2143 = vmul.f32 %v2132, %v2137
        %v2144 = vmul.f32 %v2133, %v2137
        %v2145 = vmul.f32 %v2134, %v2137
        %v2146 = vmul.f32 %v2135, %v2137
        %v2147 = vadd.f32 %v2118, %v2139
        %v2148 = vadd.f32 %v2119, %v2140
        %v2149 = vadd.f32 %v2120, %v2141
        %v2150 = vadd.f32 %v2121, %v2142
        %v2151 = vadd.f32 %v2122, %v2143
        %v2152 = vadd.f32 %v2123, %v2144
        %v2153 = vadd.f32 %v2124, %v2145
        %v2154 = vadd.f32 %v2125, %v2146
        %s2155 = scalar_lea.vmem %s4, 4
        %v2156 = vld [vmem:[%s2155] sm:$0x1]
        %v2157 = vld [vmem:[%s2031 + $0x1] sm:$0xff]
        %v2158 = vld [vmem:[%s2031 + $0x11] sm:$0xff]
        %v2159 = vld [vmem:[%s2031 + $0x21] sm:$0xff]
        %v2160 = vld [vmem:[%s2031 + $0x31] sm:$0xff]
        %v2161 = vld [vmem:[%s2031 + $0x41] sm:$0xff]
        %v2162 = vld [vmem:[%s2031 + $0x51] sm:$0xff]
        %v2163 = vld [vmem:[%s2031 + $0x61] sm:$0xff]
        %v2164 = vld [vmem:[%s2031 + $0x71] sm:$0xff]
        %v2166 = vperm.slane %v2156, 0
        %v2168 = vmul.f32 %v2157, %v2166
        %v2169 = vmul.f32 %v2158, %v2166
        %v2170 = vmul.f32 %v2159, %v2166
        %v2171 = vmul.f32 %v2160, %v2166
        %v2172 = vmul.f32 %v2161, %v2166
        %v2173 = vmul.f32 %v2162, %v2166
        %v2174 = vmul.f32 %v2163, %v2166
        %v2175 = vmul.f32 %v2164, %v2166
        %v2176 = vadd.f32 %v2147, %v2168
        %v2177 = vadd.f32 %v2148, %v2169
        %v2178 = vadd.f32 %v2149, %v2170
        %v2179 = vadd.f32 %v2150, %v2171
        %v2180 = vadd.f32 %v2151, %v2172
        %v2181 = vadd.f32 %v2152, %v2173
        %v2182 = vadd.f32 %v2153, %v2174
        %v2183 = vadd.f32 %v2154, %v2175
        %s2184 = scalar_lea.vmem %s4, 5
        %v2185 = vld [vmem:[%s2184] sm:$0x1]
        %v2186 = vld [vmem:[%s2031 + $0x2] sm:$0xff]
        %v2187 = vld [vmem:[%s2031 + $0x12] sm:$0xff]
        %v2188 = vld [vmem:[%s2031 + $0x22] sm:$0xff]
        %v2189 = vld [vmem:[%s2031 + $0x32] sm:$0xff]
        %v2190 = vld [vmem:[%s2031 + $0x42] sm:$0xff]
        %v2191 = vld [vmem:[%s2031 + $0x52] sm:$0xff]
        %v2192 = vld [vmem:[%s2031 + $0x62] sm:$0xff]
        %v2193 = vld [vmem:[%s2031 + $0x72] sm:$0xff]
        %v2195 = vperm.slane %v2185, 0
        %v2197 = vmul.f32 %v2186, %v2195
        %v2198 = vmul.f32 %v2187, %v2195
        %v2199 = vmul.f32 %v2188, %v2195
        %v2200 = vmul.f32 %v2189, %v2195
        %v2201 = vmul.f32 %v2190, %v2195
        %v2202 = vmul.f32 %v2191, %v2195
        %v2203 = vmul.f32 %v2192, %v2195
        %v2204 = vmul.f32 %v2193, %v2195
        %v2205 = vadd.f32 %v2176, %v2197
        %v2206 = vadd.f32 %v2177, %v2198
        %v2207 = vadd.f32 %v2178, %v2199
        %v2208 = vadd.f32 %v2179, %v2200
        %v2209 = vadd.f32 %v2180, %v2201
        %v2210 = vadd.f32 %v2181, %v2202
        %v2211 = vadd.f32 %v2182, %v2203
        %v2212 = vadd.f32 %v2183, %v2204
        %s2213 = scalar_lea.vmem %s4, 6
        %v2214 = vld [vmem:[%s2213] sm:$0x1]
        %s2215 = scalar_lea.vmem [#allocation4], 32
        %v2216 = vld [vmem:[%s2215] sm:$0xff]
        %v2217 = vld [vmem:[%s2215 + $0x10] sm:$0xff]
        %v2218 = vld [vmem:[%s2215 + $0x20] sm:$0xff]
        %v2219 = vld [vmem:[%s2215 + $0x30] sm:$0xff]
        %v2220 = vld [vmem:[%s2215 + $0x40] sm:$0xff]
        %v2221 = vld [vmem:[%s2215 + $0x50] sm:$0xff]
        %v2222 = vld [vmem:[%s2215 + $0x60] sm:$0xff]
        %v2223 = vld [vmem:[%s2215 + $0x70] sm:$0xff]
        %v2225 = vperm.slane %v2214, 0
        %v2227 = vmul.f32 %v2216, %v2225
        %v2228 = vmul.f32 %v2217, %v2225
        %v2229 = vmul.f32 %v2218, %v2225
        %v2230 = vmul.f32 %v2219, %v2225
        %v2231 = vmul.f32 %v2220, %v2225
        %v2232 = vmul.f32 %v2221, %v2225
        %v2233 = vmul.f32 %v2222, %v2225
        %v2234 = vmul.f32 %v2223, %v2225
        %v2235 = vadd.f32 %v2205, %v2227
        %v2236 = vadd.f32 %v2206, %v2228
        %v2237 = vadd.f32 %v2207, %v2229
        %v2238 = vadd.f32 %v2208, %v2230
        %v2239 = vadd.f32 %v2209, %v2231
        %v2240 = vadd.f32 %v2210, %v2232
        %v2241 = vadd.f32 %v2211, %v2233
        %v2242 = vadd.f32 %v2212, %v2234
        %s2243 = scalar_lea.vmem %s4, 7
        %v2244 = vld [vmem:[%s2243] sm:$0x1]
        %v2245 = vld [vmem:[%s2215 + $0x1] sm:$0xff]
        %v2246 = vld [vmem:[%s2215 + $0x11] sm:$0xff]
        %v2247 = vld [vmem:[%s2215 + $0x21] sm:$0xff]
        %v2248 = vld [vmem:[%s2215 + $0x31] sm:$0xff]
        %v2249 = vld [vmem:[%s2215 + $0x41] sm:$0xff]
        %v2250 = vld [vmem:[%s2215 + $0x51] sm:$0xff]
        %v2251 = vld [vmem:[%s2215 + $0x61] sm:$0xff]
        %v2252 = vld [vmem:[%s2215 + $0x71] sm:$0xff]
        %v2254 = vperm.slane %v2244, 0
        %v2256 = vmul.f32 %v2245, %v2254
        %v2257 = vmul.f32 %v2246, %v2254
        %v2258 = vmul.f32 %v2247, %v2254
        %v2259 = vmul.f32 %v2248, %v2254
        %v2260 = vmul.f32 %v2249, %v2254
        %v2261 = vmul.f32 %v2250, %v2254
        %v2262 = vmul.f32 %v2251, %v2254
        %v2263 = vmul.f32 %v2252, %v2254
        %v2264 = vadd.f32 %v2235, %v2256
        %v2265 = vadd.f32 %v2236, %v2257
        %v2266 = vadd.f32 %v2237, %v2258
        %v2267 = vadd.f32 %v2238, %v2259
        %v2268 = vadd.f32 %v2239, %v2260
        %v2269 = vadd.f32 %v2240, %v2261
        %v2270 = vadd.f32 %v2241, %v2262
        %v2271 = vadd.f32 %v2242, %v2263
        %s2272 = scalar_lea.vmem %s4, 8
        %v2273 = vld [vmem:[%s2272] sm:$0x1]
        %v2274 = vld [vmem:[%s2215 + $0x2] sm:$0xff]
        %v2275 = vld [vmem:[%s2215 + $0x12] sm:$0xff]
        %v2276 = vld [vmem:[%s2215 + $0x22] sm:$0xff]
        %v2277 = vld [vmem:[%s2215 + $0x32] sm:$0xff]
        %v2278 = vld [vmem:[%s2215 + $0x42] sm:$0xff]
        %v2279 = vld [vmem:[%s2215 + $0x52] sm:$0xff]
        %v2280 = vld [vmem:[%s2215 + $0x62] sm:$0xff]
        %v2281 = vld [vmem:[%s2215 + $0x72] sm:$0xff]
        %v2283 = vperm.slane %v2273, 0
        %v2285 = vmul.f32 %v2274, %v2283
        %v2286 = vmul.f32 %v2275, %v2283
        %v2287 = vmul.f32 %v2276, %v2283
        %v2288 = vmul.f32 %v2277, %v2283
        %v2289 = vmul.f32 %v2278, %v2283
        %v2290 = vmul.f32 %v2279, %v2283
        %v2291 = vmul.f32 %v2280, %v2283
        %v2292 = vmul.f32 %v2281, %v2283
        %v2293 = vadd.f32 %v2264, %v2285
        %v2294 = vadd.f32 %v2265, %v2286
        %v2295 = vadd.f32 %v2266, %v2287
        %v2296 = vadd.f32 %v2267, %v2288
        %v2297 = vadd.f32 %v2268, %v2289
        %v2298 = vadd.f32 %v2269, %v2290
        %v2299 = vadd.f32 %v2270, %v2291
        %v2300 = vadd.f32 %v2271, %v2292
        %v2301 = vld [vmem:[%s5] sm:$0x1]
        %v2303 = vperm.slane %v2301, 0
        %v2305 = vmul.f32 %v2293, %v2303
        %v2306 = vmul.f32 %v2294, %v2303
        %v2307 = vmul.f32 %v2295, %v2303
        %v2308 = vmul.f32 %v2296, %v2303
        %v2309 = vmul.f32 %v2297, %v2303
        %v2310 = vmul.f32 %v2298, %v2303
        %v2311 = vmul.f32 %v2299, %v2303
        %v2312 = vmul.f32 %v2300, %v2303
        %v2313 = vld [vmem:[%s6] sm:$0x1]
        %v2315 = vperm.slane %v2313, 0
        %v2317 = vadd.f32 %v2305, %v2315
        %v2318 = vadd.f32 %v2306, %v2315
        %v2319 = vadd.f32 %v2307, %v2315
        %v2320 = vadd.f32 %v2308, %v2315
        %v2321 = vadd.f32 %v2309, %v2315
        %v2322 = vadd.f32 %v2310, %v2315
        %v2323 = vadd.f32 %v2311, %v2315
        %v2324 = vadd.f32 %v2312, %v2315
        %v2325 = vmax.f32 %v2317, 0.0
        %v2326 = vmax.f32 %v2318, 0.0
        %v2327 = vmax.f32 %v2319, 0.0
        %v2328 = vmax.f32 %v2320, 0.0
        %v2329 = vmax.f32 %v2321, 0.0
        %v2330 = vmax.f32 %v2322, 0.0
        %v2331 = vmax.f32 %v2323, 0.0
        %v2332 = vmax.f32 %v2324, 0.0
        %v2333 = vpack.c.bf16 %v2326, %v2325
        %v2334 = vpack.c.bf16 %v2328, %v2327
        %v2335 = vpack.c.bf16 %v2330, %v2329
        %v2336 = vpack.c.bf16 %v2332, %v2331
        %v2337 = vld [vmem:[%s10] sm:$0xff]
        %v2338 = vpack.c.bf16 %v2337, %v2337
        %v2340 = vsel %vm2009, %v2333, 0
        %v2343 = vsel %vm2009, %v2334, 0
        %v2346 = vsel %vm2009, %v2335, 0
        %v2349 = vsel %vm2009, %v2336, 0
        %vm2351 = vcmask 1043456
        %v2353 = vsel %vm2351, %v2338, 0
        %2355 = vmatpush.bf16.msra.mxu0 0
        %2356 = vmatpush.bf16.msra.mxu0 0
        %2357 = vmatpush.bf16.msra.mxu0 0
        %2358 = vmatpush.bf16.msra.mxu0 0
        %2359 = vmatpush.bf16.msra.mxu0 0
        %2360 = vmatpush.bf16.msra.mxu0 0
        %2361 = vmatpush.bf16.msra.mxu0 0
        %2362 = vmatpush.bf16.msra.mxu0 %v2353
        %2363 = vmatmul.bf16.gmra.mxu0 %v2340
        %v2364 = vpop.f32.mrf.mxu0
        %v2365 = vadd.f32 0.0, %v2364
        %v2366 = vpop.f32.mrf.mxu0
        %v2367 = vadd.f32 0.0, %v2366
        %2368 = vmatmul.bf16.gmra.mxu0 %v2343
        %v2369 = vpop.f32.mrf.mxu0
        %v2370 = vadd.f32 0.0, %v2369
        %v2371 = vpop.f32.mrf.mxu0
        %v2372 = vadd.f32 0.0, %v2371
        %2373 = vmatmul.bf16.gmra.mxu0 %v2346
        %v2374 = vpop.f32.mrf.mxu0
        %v2375 = vadd.f32 0.0, %v2374
        %v2376 = vpop.f32.mrf.mxu0
        %v2377 = vadd.f32 0.0, %v2376
        %2378 = vmatmul.bf16.gmra.mxu0 %v2349
        %v2379 = vpop.f32.mrf.mxu0
        %v2380 = vadd.f32 0.0, %v2379
        %v2381 = vpop.f32.mrf.mxu0
        %v2382 = vadd.f32 0.0, %v2381
        %2383 = vdwg.mxu0
        %v2384 = vld [vmem:[%s11] sm:$0x1]
        %v2386 = vperm.slane %v2384, 0
        %v2388 = vmul.f32 %v2365, %v2386
        %v2389 = vmul.f32 %v2367, %v2386
        %v2390 = vmul.f32 %v2370, %v2386
        %v2391 = vmul.f32 %v2372, %v2386
        %v2392 = vmul.f32 %v2375, %v2386
        %v2393 = vmul.f32 %v2377, %v2386
        %v2394 = vmul.f32 %v2380, %v2386
        %v2395 = vmul.f32 %v2382, %v2386
        %v2396 = vld [vmem:[%s12] sm:$0x1]
        %v2398 = vperm.slane %v2396, 0
        %v2400 = vadd.f32 %v2388, %v2398
        %v2401 = vadd.f32 %v2389, %v2398
        %v2402 = vadd.f32 %v2390, %v2398
        %v2403 = vadd.f32 %v2391, %v2398
        %v2404 = vadd.f32 %v2392, %v2398
        %v2405 = vadd.f32 %v2393, %v2398
        %v2406 = vadd.f32 %v2394, %v2398
        %v2407 = vadd.f32 %v2395, %v2398
        %v2408 = vmax.f32 %v2400, 0.0
        %v2409 = vmax.f32 %v2401, 0.0
        %v2410 = vmax.f32 %v2402, 0.0
        %v2411 = vmax.f32 %v2403, 0.0
        %v2412 = vmax.f32 %v2404, 0.0
        %v2413 = vmax.f32 %v2405, 0.0
        %v2414 = vmax.f32 %v2406, 0.0
        %v2415 = vmax.f32 %v2407, 0.0
        %2416 = vst.msk [vmem:[%s433] sm:$0xff] %vm2009, %v2408
        %2417 = vst.msk [vmem:[%s433 + $0x8] sm:$0xff] %vm2009, %v2409
        %2418 = vst.msk [vmem:[%s433 + $0x10] sm:$0xff] %vm2009, %v2410
        %2419 = vst.msk [vmem:[%s433 + $0x18] sm:$0xff] %vm2009, %v2411
        %2420 = vst.msk [vmem:[%s433 + $0x20] sm:$0xff] %vm2009, %v2412
        %2421 = vst.msk [vmem:[%s433 + $0x28] sm:$0xff] %vm2009, %v2413
        %2422 = vst.msk [vmem:[%s433 + $0x30] sm:$0xff] %vm2009, %v2414
        %2423 = vst.msk [vmem:[%s433 + $0x38] sm:$0xff] %vm2009, %v2415
        %s2424 = sand.u32 %s313, 1
        %s2425 = scalar_lea.sflag [#allocation6], %s2424
        %s2426 = sand.u32 %s313, 1
        %s2427 = smul.addr %s2426, 64
        %s2428 = scalar_lea.vmem [#allocation5], %s2427
        // Predicated region
        $region73: #{tpu_custom_call.1} parent=71 // pred_check
          %p2429 = pneg %p323
        $region74: #{tpu_custom_call.1} parent=71 // pred_check_branch
          %2431 = sbr.rel (%p2429) target = $region76
        $region75: #{tpu_custom_call.1} parent=71 // pred_region
          %2433 = vsyncadd %s2425, 0
          %s2434 = smul.addr %s27, 8
          %s2435 = smul.addr %s2434, 8
          %s2436 = scalar_lea.hbm %s13, %s2435
          %s2437 = sshll.u32 %s2428, 4
          %s2438 = int_to_ptr.vmem [resolvable:$true] %s2437
          %s2439 = sshll.u32 %s2436, 4
          %s2440 = int_to_ptr.hbm [resolvable:$true] %s2439
          %2445 = dma.vmem_to_hbm [thread:$0]  %s2438, 1024, %s2440, %s2425, 128, 128, 8
        $region76: #{tpu_custom_call.1} parent=71 // pred_fallthru
          _
      $region72: #{tpu_custom_call.1} parent=5 // pred_fallthru
        _
      %p2446 = scmp.le.s32.totalorder 2, %s22
      // Predicated region
      $region77: #{tpu_custom_call.1} parent=5 // pred_check
        %p2447 = pneg %p2446
      $region78: #{tpu_custom_call.1} parent=5 // pred_check_branch
        %2449 = sbr.rel (%p2447) target = $region80
      $region79: #{tpu_custom_call.1} parent=5 // pred_region
        %s2450 = ssub.s32 %s22, 2
        // Predicated region
        $region81: #{tpu_custom_call.1} parent=79 // pred_check
          %p2451 = pneg %p329
        $region82: #{tpu_custom_call.1} parent=79 // pred_check_branch
          %2453 = sbr.rel (%p2451) target = $region84
        $region83: #{tpu_custom_call.1} parent=79 // pred_region
          %s2454 = sand.u32 %s314, 1
          %s2455 = scalar_lea.sflag [#allocation6], %s2454
          %s2456 = sand.u32 %s314, 1
          %s2457 = smul.addr %s2456, 64
          %s2458 = scalar_lea.vmem [#allocation5], %s2457
          %2460 = dma.done %s2455, 1024
        $region84: #{tpu_custom_call.1} parent=79 // pred_fallthru
          _
      $region80: #{tpu_custom_call.1} parent=5 // pred_fallthru
        _
    $region6: #{tpu_custom_call.1} parent=1 // loop_footer
      %s26 = sadd.s32 1, %s22
    $region7: #{tpu_custom_call.1} parent=1 // loop_footer_branch
      %21 = sbr.rel target = $region3
    $region8: #{tpu_custom_call.1} parent=1 // loop_exit
      _
    %2461 = vsyncpa [#allocation6], 1
    %s2462 = scalar_lea.sflag [#allocation6], 1
    %2463 = vsyncpa %s2462, 1

</llo_original>
